<compile_context>
chip_gen: v5e
topology: v5e:2x2
jax: 0.10.0
libtpu: 0.0.40
codegen_flags: <defaults>
</compile_context>

<pallas_src>
import jax
import jax.numpy as jnp
from jax.experimental import pallas as pl
from jax.experimental.pallas import tpu as pltpu


# ----------------------------- model hyper-parameters -----------------------------
IMAGE_SIZE = 16
PATCH_SIZE = 4
PATCH_DIM = IMAGE_SIZE // PATCH_SIZE          # 4
FRAMES = 4
WINDOW_SIZE = (2, 2, 2)                       # (T, H, W)
HIDDEN_DIM = 32
QUERY_DIM = HIDDEN_DIM                        # forward() requires hidden_dim == C
NUM_HEADS = 4
HEAD_DIM = HIDDEN_DIM // NUM_HEADS            # 8

T_WIN, H_WIN, W_WIN = WINDOW_SIZE
N_T = FRAMES // T_WIN                         # 2
N_H = PATCH_DIM // H_WIN                      # 2
N_W = PATCH_DIM // W_WIN                      # 2
N_WIN = N_T * N_H * N_W                       # 8
L_WIN = T_WIN * H_WIN * W_WIN                 # 8 tokens per window
SEQ_LEN = FRAMES * PATCH_DIM * PATCH_DIM      # 64

_NEG_BIG = jnp.float32(-1e30)


# ------------------------------------ kernel ---------------------------------------
def _attn_kernel(x_ref, wqkv_ref, wo_ref, bo_ref, bias_ref, o_ref):
    """One batch element: fused QKV projection, masked windowed MHA, fused out-proj."""
    x = x_ref[0]                                   # (N, C) = (64, 32) f32
    wqkv = wqkv_ref[...]                           # (C, 3*HID)
    wo = wo_ref[...]                               # (HID, HID)
    bias = bias_ref[...]                           # (N, N) additive window mask

    qkv = jnp.dot(x, wqkv, preferred_element_type=jnp.float32)      # (N, 3*HID)
    scale = jnp.float32(1.0) / jnp.sqrt(jnp.float32(HEAD_DIM))

    y = jnp.zeros((SEQ_LEN, HIDDEN_DIM), jnp.float32)
    for h in range(NUM_HEADS):                     # static unroll (4 heads)
        lo = h * HEAD_DIM
        hi = lo + HEAD_DIM
        qh = qkv[:, lo:hi]                                           # (N, hd)
        kh = qkv[:, HIDDEN_DIM + lo:HIDDEN_DIM + hi]                 # (N, hd)
        vh = qkv[:, 2 * HIDDEN_DIM + lo:2 * HIDDEN_DIM + hi]         # (N, hd)

        # Scores over all 64 tokens; off-window pairs masked to -1e30 before softmax,
        # which makes this exactly the per-window softmax of the reference module.
        s = jax.lax.dot_general(qh, kh, (((1,), (1,)), ((), ())),
                                preferred_element_type=jnp.float32)  # (N, N)
        s = s * scale + bias
        s = s - jnp.max(s, axis=-1, keepdims=True)
        p = jnp.exp(s)
        p = p * pl.reciprocal(jnp.sum(p, axis=-1, keepdims=True), approx=True)

        head_out = jnp.dot(p, vh, preferred_element_type=jnp.float32)       # (N, hd)
        # Fold this head's slice of the output projection (no concatenate needed).
        y = y + jnp.dot(head_out, wo[lo:hi, :], preferred_element_type=jnp.float32)

    y = y + bo_ref[...]                            # (1, HID) broadcast
    o_ref[0] = y.astype(o_ref.dtype)


# ------------------------------- window mask (host-side) ---------------------------
def _window_bias():
    """(N, N) additive bias: 0 if tokens share a (T,H,W) window, -1e30 otherwise."""
    n = jnp.arange(SEQ_LEN)
    t = n // (PATCH_DIM * PATCH_DIM)
    h = (n // PATCH_DIM) % PATCH_DIM
    w = n % PATCH_DIM
    wid = (t // T_WIN) * (N_H * N_W) + (h // H_WIN) * N_W + (w // W_WIN)
    same = wid[:, None] == wid[None, :]
    return jnp.where(same, jnp.float32(0.0), _NEG_BIG)


# --------------------------------------- wrapper ------------------------------------
@jax.jit
def spatiotemporal_attention(x, wq, wk, wv, wo, bo):
    """x: (B, N, C) channels-last, same layout as the PyTorch module."""
    B = x.shape[0]
    wqkv = jnp.concatenate([wq, wk, wv], axis=1)   # (C, 3*HID), fused QKV weight
    bias = _window_bias()                          # (N, N)

    full2d = lambda b: (0, 0)
    return pl.pallas_call(
        _attn_kernel,
        out_shape=jax.ShapeDtypeStruct((B, SEQ_LEN, HIDDEN_DIM), x.dtype),
        grid_spec=pltpu.PrefetchScalarGridSpec(
            num_scalar_prefetch=0,
            grid=(B,),
            in_specs=[
                pl.BlockSpec((1, SEQ_LEN, QUERY_DIM), lambda b: (b, 0, 0)),
                pl.BlockSpec((QUERY_DIM, 3 * HIDDEN_DIM), full2d),
                pl.BlockSpec((HIDDEN_DIM, HIDDEN_DIM), full2d),
                pl.BlockSpec((1, HIDDEN_DIM), full2d),
                pl.BlockSpec((SEQ_LEN, SEQ_LEN), full2d),
            ],
            out_specs=pl.BlockSpec((1, SEQ_LEN, HIDDEN_DIM), lambda b: (b, 0, 0)),
        ),
        compiler_params=pltpu.CompilerParams(dimension_semantics=("parallel",)),
    )(x, wqkv, wo, bo, bias)


# ---------------------------------- pure-JAX reference -----------------------------
# Implements the original torch semantics literally (explicit window extraction,
# per-window per-head softmax, window merge) as an independent cross-check.
def _extract_windows(x):
    B = x.shape[0]
    x = x.reshape(B, FRAMES, PATCH_DIM, PATCH_DIM, QUERY_DIM)
    x = x.reshape(B, N_T, T_WIN, N_H, H_WIN, N_W, W_WIN, QUERY_DIM)
    x = jnp.transpose(x, (0, 1, 3, 5, 2, 4, 6, 7))     # (B, nT, nH, nW, T, H, W, C)
    return x.reshape(B, N_WIN, L_WIN, QUERY_DIM)


def _merge_windows(w):
    B = w.shape[0]
    w = w.reshape(B, N_T, N_H, N_W, T_WIN, H_WIN, W_WIN, HIDDEN_DIM)
    w = jnp.transpose(w, (0, 1, 4, 2, 5, 3, 6, 7))     # (B, nT, T, nH, H, nW, W, C)
    return w.reshape(B, SEQ_LEN, HIDDEN_DIM)


def _reference(x, wq, wk, wv, wo, bo):
    x_win = _extract_windows(x)                                        # (B, nWin, L, C)
    q = x_win @ wq
    k = x_win @ wk
    v = x_win @ wv

    def split_heads(t):  # (B, nWin, L, HID) -> (B, heads, nWin, L, hd)
        B = t.shape[0]
        t = t.reshape(B, N_WIN, L_WIN, NUM_HEADS, HEAD_DIM)
        return jnp.transpose(t, (0, 3, 1, 2, 4))

    qh, kh, vh = split_heads(q), split_heads(k), split_heads(v)
    attn = jnp.einsum("bhnld,bhnmd->bhnlm", qh, kh) / jnp.sqrt(jnp.float32(HEAD_DIM))
    attn = jax.nn.softmax(attn, axis=-1)
    o = jnp.einsum("bhnlm,bhnmd->bhnld", attn, vh)
    o = jnp.transpose(o, (0, 2, 3, 1, 4)).reshape(x_win.shape[0], N_WIN, L_WIN, HIDDEN_DIM)
    o = o @ wo + bo[0]
    return _merge_windows(o)


# ------------------------------------- main -----------------------------------------
if __name__ == "__main__":
    key = jax.random.PRNGKey(0)
    kx, kq, kk, kv, ko, kb = jax.random.split(key, 6)

    B = 2
    x = jax.random.normal(kx, (B, SEQ_LEN, QUERY_DIM), dtype=jnp.float32)

    # Deterministic synthetic parameters; stored as (in_dim, out_dim) so y = x @ W.
    wq = 0.05 * jax.random.normal(kq, (QUERY_DIM, HIDDEN_DIM), dtype=jnp.float32)
    wk = 0.05 * jax.random.normal(kk, (QUERY_DIM, HIDDEN_DIM), dtype=jnp.float32)
    wv = 0.05 * jax.random.normal(kv, (QUERY_DIM, HIDDEN_DIM), dtype=jnp.float32)
    wo = 0.05 * jax.random.normal(ko, (HIDDEN_DIM, HIDDEN_DIM), dtype=jnp.float32)
    bo = 0.05 * jax.random.normal(kb, (1, HIDDEN_DIM), dtype=jnp.float32)

    out = spatiotemporal_attention(x, wq, wk, wv, wo, bo)
    out = jax.block_until_ready(out)

    ref = jax.block_until_ready(_reference(x, wq, wk, wv, wo, bo))
    assert out.shape == (B, SEQ_LEN, HIDDEN_DIM), out.shape
    err = float(jnp.max(jnp.abs(out - ref)))
    # Tolerance accounts for the EUP approximate reciprocal in the softmax denominator.
    assert jnp.allclose(out, ref, atol=1e-3, rtol=1e-3), err

    print("KERNEL_OK")
</pallas_src>

<mosaic_0001>
module attributes {stable_mosaic.version = 11 : i64} {
  func.func @_attn_kernel(%arg0: i32, %arg1: memref<1x64x32xf32, #tpu.memory_space<vmem>>, %arg2: memref<32x96xf32, #tpu.memory_space<vmem>>, %arg3: memref<32x32xf32, #tpu.memory_space<vmem>>, %arg4: memref<1x32xf32, #tpu.memory_space<vmem>>, %arg5: memref<64x64xf32, #tpu.memory_space<vmem>>, %arg6: memref<1x64x32xf32, #tpu.memory_space<vmem>>) attributes {dimension_semantics = [#tpu.dimension_semantics<parallel>], iteration_bounds = array<i64: 2>, scalar_prefetch = 0 : i64, scratch_operands = 0 : i64, tpu.core_type = #tpu.core_type<tc>, window_params = [{transform_indices = @transform_0, window_bounds = array<i64: 1, 64, 32>}, {pipeline_mode = #tpu.pipeline_mode<synchronous>, transform_indices = @transform_1, window_bounds = array<i64: 32, 96>}, {pipeline_mode = #tpu.pipeline_mode<synchronous>, transform_indices = @transform_2, window_bounds = array<i64: 32, 32>}, {pipeline_mode = #tpu.pipeline_mode<synchronous>, transform_indices = @transform_3, window_bounds = array<i64: 1, 32>}, {pipeline_mode = #tpu.pipeline_mode<synchronous>, transform_indices = @transform_4, window_bounds = array<i64: 64, 64>}, {transform_indices = @transform_5, window_bounds = array<i64: 1, 64, 32>}]} {
    %c0 = arith.constant 0 : index
    %c0_0 = arith.constant 0 : index
    %c0_1 = arith.constant 0 : index
    %0 = vector.load %arg1[%c0, %c0_0, %c0_1] : memref<1x64x32xf32, #tpu.memory_space<vmem>>, vector<1x64x32xf32>
    %1 = vector.shape_cast %0 : vector<1x64x32xf32> to vector<64x32xf32>
    %c0_2 = arith.constant 0 : index
    %c0_3 = arith.constant 0 : index
    %2 = vector.load %arg2[%c0_2, %c0_3] : memref<32x96xf32, #tpu.memory_space<vmem>>, vector<32x96xf32>
    %c0_4 = arith.constant 0 : index
    %c0_5 = arith.constant 0 : index
    %3 = vector.load %arg3[%c0_4, %c0_5] : memref<32x32xf32, #tpu.memory_space<vmem>>, vector<32x32xf32>
    %c0_6 = arith.constant 0 : index
    %c0_7 = arith.constant 0 : index
    %4 = vector.load %arg5[%c0_6, %c0_7] : memref<64x64xf32, #tpu.memory_space<vmem>>, vector<64x64xf32>
    %cst = arith.constant dense<0.000000e+00> : vector<64x96xf32>
    %5 = tpu.matmul %1, %2, %cst {dimension_numbers = #tpu.dot_dimension_numbers<[1], [0], [0], [1], [0, 0, 1, 1], [], []>} : vector<64x32xf32>, vector<32x96xf32>, vector<64x96xf32> -> vector<64x96xf32>
    %cst_8 = arith.constant 8.000000e+00 : f32
    %6 = math.sqrt %cst_8 : f32
    %cst_9 = arith.constant 1.000000e+00 : f32
    %7 = arith.divf %cst_9, %6 : f32
    %cst_10 = arith.constant 0.000000e+00 : f32
    %8 = vector.broadcast %cst_10 : f32 to vector<64x32xf32>
    %9 = vector.extract_strided_slice %5 {offsets = [0, 0], sizes = [64, 8], strides = [1, 1]} : vector<64x96xf32> to vector<64x8xf32>
    %10 = vector.extract_strided_slice %5 {offsets = [0, 32], sizes = [64, 8], strides = [1, 1]} : vector<64x96xf32> to vector<64x8xf32>
    %11 = vector.extract_strided_slice %5 {offsets = [0, 64], sizes = [64, 8], strides = [1, 1]} : vector<64x96xf32> to vector<64x8xf32>
    %cst_11 = arith.constant dense<0.000000e+00> : vector<64x64xf32>
    %12 = tpu.matmul %9, %10, %cst_11 {dimension_numbers = #tpu.dot_dimension_numbers<[1], [1], [0], [0], [0, 0, 1, 0], [], []>} : vector<64x8xf32>, vector<64x8xf32>, vector<64x64xf32> -> vector<64x64xf32>
    %13 = vector.broadcast %7 : f32 to vector<64x64xf32>
    %14 = arith.mulf %12, %13 : vector<64x64xf32>
    %15 = arith.addf %14, %4 : vector<64x64xf32>
    %cst_12 = arith.constant dense<0xFF800000> : vector<64xf32>
    %16 = vector.multi_reduction <maximumf>, %15, %cst_12 [1] : vector<64x64xf32> to vector<64xf32>
    %17 = vector.shape_cast %16 : vector<64xf32> to vector<64x1xf32>
    %18 = vector.broadcast %17 : vector<64x1xf32> to vector<64x64xf32>
    %19 = arith.subf %15, %18 : vector<64x64xf32>
    %20 = math.exp %19 : vector<64x64xf32>
    %cst_13 = arith.constant dense<0.000000e+00> : vector<64xf32>
    %21 = vector.multi_reduction <add>, %20, %cst_13 [1] : vector<64x64xf32> to vector<64xf32>
    %22 = vector.shape_cast %21 : vector<64xf32> to vector<64x1xf32>
    %23 = tpu.reciprocal %22 {approx = true} : vector<64x1xf32> -> vector<64x1xf32>
    %24 = vector.broadcast %23 : vector<64x1xf32> to vector<64x64xf32>
    %25 = arith.mulf %20, %24 : vector<64x64xf32>
    %cst_14 = arith.constant dense<0.000000e+00> : vector<64x8xf32>
    %26 = tpu.matmul %25, %11, %cst_14 {dimension_numbers = #tpu.dot_dimension_numbers<[1], [0], [0], [1], [0, 0, 1, 1], [], []>} : vector<64x64xf32>, vector<64x8xf32>, vector<64x8xf32> -> vector<64x8xf32>
    %27 = vector.extract_strided_slice %3 {offsets = [0, 0], sizes = [8, 32], strides = [1, 1]} : vector<32x32xf32> to vector<8x32xf32>
    %cst_15 = arith.constant dense<0.000000e+00> : vector<64x32xf32>
    %28 = tpu.matmul %26, %27, %cst_15 {dimension_numbers = #tpu.dot_dimension_numbers<[1], [0], [0], [1], [0, 0, 1, 1], [], []>} : vector<64x8xf32>, vector<8x32xf32>, vector<64x32xf32> -> vector<64x32xf32>
    %29 = arith.addf %8, %28 : vector<64x32xf32>
    %30 = vector.extract_strided_slice %5 {offsets = [0, 8], sizes = [64, 8], strides = [1, 1]} : vector<64x96xf32> to vector<64x8xf32>
    %31 = vector.extract_strided_slice %5 {offsets = [0, 40], sizes = [64, 8], strides = [1, 1]} : vector<64x96xf32> to vector<64x8xf32>
    %32 = vector.extract_strided_slice %5 {offsets = [0, 72], sizes = [64, 8], strides = [1, 1]} : vector<64x96xf32> to vector<64x8xf32>
    %cst_16 = arith.constant dense<0.000000e+00> : vector<64x64xf32>
    %33 = tpu.matmul %30, %31, %cst_16 {dimension_numbers = #tpu.dot_dimension_numbers<[1], [1], [0], [0], [0, 0, 1, 0], [], []>} : vector<64x8xf32>, vector<64x8xf32>, vector<64x64xf32> -> vector<64x64xf32>
    %34 = vector.broadcast %7 : f32 to vector<64x64xf32>
    %35 = arith.mulf %33, %34 : vector<64x64xf32>
    %36 = arith.addf %35, %4 : vector<64x64xf32>
    %cst_17 = arith.constant dense<0xFF800000> : vector<64xf32>
    %37 = vector.multi_reduction <maximumf>, %36, %cst_17 [1] : vector<64x64xf32> to vector<64xf32>
    %38 = vector.shape_cast %37 : vector<64xf32> to vector<64x1xf32>
    %39 = vector.broadcast %38 : vector<64x1xf32> to vector<64x64xf32>
    %40 = arith.subf %36, %39 : vector<64x64xf32>
    %41 = math.exp %40 : vector<64x64xf32>
    %cst_18 = arith.constant dense<0.000000e+00> : vector<64xf32>
    %42 = vector.multi_reduction <add>, %41, %cst_18 [1] : vector<64x64xf32> to vector<64xf32>
    %43 = vector.shape_cast %42 : vector<64xf32> to vector<64x1xf32>
    %44 = tpu.reciprocal %43 {approx = true} : vector<64x1xf32> -> vector<64x1xf32>
    %45 = vector.broadcast %44 : vector<64x1xf32> to vector<64x64xf32>
    %46 = arith.mulf %41, %45 : vector<64x64xf32>
    %cst_19 = arith.constant dense<0.000000e+00> : vector<64x8xf32>
    %47 = tpu.matmul %46, %32, %cst_19 {dimension_numbers = #tpu.dot_dimension_numbers<[1], [0], [0], [1], [0, 0, 1, 1], [], []>} : vector<64x64xf32>, vector<64x8xf32>, vector<64x8xf32> -> vector<64x8xf32>
    %48 = vector.extract_strided_slice %3 {offsets = [8, 0], sizes = [8, 32], strides = [1, 1]} : vector<32x32xf32> to vector<8x32xf32>
    %cst_20 = arith.constant dense<0.000000e+00> : vector<64x32xf32>
    %49 = tpu.matmul %47, %48, %cst_20 {dimension_numbers = #tpu.dot_dimension_numbers<[1], [0], [0], [1], [0, 0, 1, 1], [], []>} : vector<64x8xf32>, vector<8x32xf32>, vector<64x32xf32> -> vector<64x32xf32>
    %50 = arith.addf %29, %49 : vector<64x32xf32>
    %51 = vector.extract_strided_slice %5 {offsets = [0, 16], sizes = [64, 8], strides = [1, 1]} : vector<64x96xf32> to vector<64x8xf32>
    %52 = vector.extract_strided_slice %5 {offsets = [0, 48], sizes = [64, 8], strides = [1, 1]} : vector<64x96xf32> to vector<64x8xf32>
    %53 = vector.extract_strided_slice %5 {offsets = [0, 80], sizes = [64, 8], strides = [1, 1]} : vector<64x96xf32> to vector<64x8xf32>
    %cst_21 = arith.constant dense<0.000000e+00> : vector<64x64xf32>
    %54 = tpu.matmul %51, %52, %cst_21 {dimension_numbers = #tpu.dot_dimension_numbers<[1], [1], [0], [0], [0, 0, 1, 0], [], []>} : vector<64x8xf32>, vector<64x8xf32>, vector<64x64xf32> -> vector<64x64xf32>
    %55 = vector.broadcast %7 : f32 to vector<64x64xf32>
    %56 = arith.mulf %54, %55 : vector<64x64xf32>
    %57 = arith.addf %56, %4 : vector<64x64xf32>
    %cst_22 = arith.constant dense<0xFF800000> : vector<64xf32>
    %58 = vector.multi_reduction <maximumf>, %57, %cst_22 [1] : vector<64x64xf32> to vector<64xf32>
    %59 = vector.shape_cast %58 : vector<64xf32> to vector<64x1xf32>
    %60 = vector.broadcast %59 : vector<64x1xf32> to vector<64x64xf32>
    %61 = arith.subf %57, %60 : vector<64x64xf32>
    %62 = math.exp %61 : vector<64x64xf32>
    %cst_23 = arith.constant dense<0.000000e+00> : vector<64xf32>
    %63 = vector.multi_reduction <add>, %62, %cst_23 [1] : vector<64x64xf32> to vector<64xf32>
    %64 = vector.shape_cast %63 : vector<64xf32> to vector<64x1xf32>
    %65 = tpu.reciprocal %64 {approx = true} : vector<64x1xf32> -> vector<64x1xf32>
    %66 = vector.broadcast %65 : vector<64x1xf32> to vector<64x64xf32>
    %67 = arith.mulf %62, %66 : vector<64x64xf32>
    %cst_24 = arith.constant dense<0.000000e+00> : vector<64x8xf32>
    %68 = tpu.matmul %67, %53, %cst_24 {dimension_numbers = #tpu.dot_dimension_numbers<[1], [0], [0], [1], [0, 0, 1, 1], [], []>} : vector<64x64xf32>, vector<64x8xf32>, vector<64x8xf32> -> vector<64x8xf32>
    %69 = vector.extract_strided_slice %3 {offsets = [16, 0], sizes = [8, 32], strides = [1, 1]} : vector<32x32xf32> to vector<8x32xf32>
    %cst_25 = arith.constant dense<0.000000e+00> : vector<64x32xf32>
    %70 = tpu.matmul %68, %69, %cst_25 {dimension_numbers = #tpu.dot_dimension_numbers<[1], [0], [0], [1], [0, 0, 1, 1], [], []>} : vector<64x8xf32>, vector<8x32xf32>, vector<64x32xf32> -> vector<64x32xf32>
    %71 = arith.addf %50, %70 : vector<64x32xf32>
    %72 = vector.extract_strided_slice %5 {offsets = [0, 24], sizes = [64, 8], strides = [1, 1]} : vector<64x96xf32> to vector<64x8xf32>
    %73 = vector.extract_strided_slice %5 {offsets = [0, 56], sizes = [64, 8], strides = [1, 1]} : vector<64x96xf32> to vector<64x8xf32>
    %74 = vector.extract_strided_slice %5 {offsets = [0, 88], sizes = [64, 8], strides = [1, 1]} : vector<64x96xf32> to vector<64x8xf32>
    %cst_26 = arith.constant dense<0.000000e+00> : vector<64x64xf32>
    %75 = tpu.matmul %72, %73, %cst_26 {dimension_numbers = #tpu.dot_dimension_numbers<[1], [1], [0], [0], [0, 0, 1, 0], [], []>} : vector<64x8xf32>, vector<64x8xf32>, vector<64x64xf32> -> vector<64x64xf32>
    %76 = vector.broadcast %7 : f32 to vector<64x64xf32>
    %77 = arith.mulf %75, %76 : vector<64x64xf32>
    %78 = arith.addf %77, %4 : vector<64x64xf32>
    %cst_27 = arith.constant dense<0xFF800000> : vector<64xf32>
    %79 = vector.multi_reduction <maximumf>, %78, %cst_27 [1] : vector<64x64xf32> to vector<64xf32>
    %80 = vector.shape_cast %79 : vector<64xf32> to vector<64x1xf32>
    %81 = vector.broadcast %80 : vector<64x1xf32> to vector<64x64xf32>
    %82 = arith.subf %78, %81 : vector<64x64xf32>
    %83 = math.exp %82 : vector<64x64xf32>
    %cst_28 = arith.constant dense<0.000000e+00> : vector<64xf32>
    %84 = vector.multi_reduction <add>, %83, %cst_28 [1] : vector<64x64xf32> to vector<64xf32>
    %85 = vector.shape_cast %84 : vector<64xf32> to vector<64x1xf32>
    %86 = tpu.reciprocal %85 {approx = true} : vector<64x1xf32> -> vector<64x1xf32>
    %87 = vector.broadcast %86 : vector<64x1xf32> to vector<64x64xf32>
    %88 = arith.mulf %83, %87 : vector<64x64xf32>
    %cst_29 = arith.constant dense<0.000000e+00> : vector<64x8xf32>
    %89 = tpu.matmul %88, %74, %cst_29 {dimension_numbers = #tpu.dot_dimension_numbers<[1], [0], [0], [1], [0, 0, 1, 1], [], []>} : vector<64x64xf32>, vector<64x8xf32>, vector<64x8xf32> -> vector<64x8xf32>
    %90 = vector.extract_strided_slice %3 {offsets = [24, 0], sizes = [8, 32], strides = [1, 1]} : vector<32x32xf32> to vector<8x32xf32>
    %cst_30 = arith.constant dense<0.000000e+00> : vector<64x32xf32>
    %91 = tpu.matmul %89, %90, %cst_30 {dimension_numbers = #tpu.dot_dimension_numbers<[1], [0], [0], [1], [0, 0, 1, 1], [], []>} : vector<64x8xf32>, vector<8x32xf32>, vector<64x32xf32> -> vector<64x32xf32>
    %92 = arith.addf %71, %91 : vector<64x32xf32>
    %c0_31 = arith.constant 0 : index
    %c0_32 = arith.constant 0 : index
    %93 = vector.load %arg4[%c0_31, %c0_32] : memref<1x32xf32, #tpu.memory_space<vmem>>, vector<1x32xf32>
    %94 = vector.broadcast %93 : vector<1x32xf32> to vector<64x32xf32>
    %95 = arith.addf %92, %94 : vector<64x32xf32>
    %c0_33 = arith.constant 0 : index
    %c0_34 = arith.constant 0 : index
    %c0_35 = arith.constant 0 : index
    %96 = vector.load %arg6[%c0_33, %c0_34, %c0_35] : memref<1x64x32xf32, #tpu.memory_space<vmem>>, vector<1x64x32xf32>
    %97 = vector.shape_cast %96 : vector<1x64x32xf32> to vector<64x32xf32>
    %98 = vector.shape_cast %95 : vector<64x32xf32> to vector<1x64x32xf32>
    tpu.vector_store %arg6[%c0_33, %c0_34, %c0_35], %98 {strides = array<i32>} : memref<1x64x32xf32, #tpu.memory_space<vmem>>, vector<1x64x32xf32>,
    return
  }
  func.func @transform_0(%arg0: i32) -> (i32, i32, i32) {
    %c0_i32 = arith.constant 0 : i32
    %c0_i32_0 = arith.constant 0 : i32
    %c0_i32_1 = arith.constant 0 : i32
    return %arg0, %c0_i32, %c0_i32_0 : i32, i32, i32
  }
  func.func @transform_1(%arg0: i32) -> (i32, i32) {
    %c0_i32 = arith.constant 0 : i32
    %c0_i32_0 = arith.constant 0 : i32
    %c0_i32_1 = arith.constant 0 : i32
    return %c0_i32, %c0_i32_0 : i32, i32
  }
  func.func @transform_2(%arg0: i32) -> (i32, i32) {
    %c0_i32 = arith.constant 0 : i32
    %c0_i32_0 = arith.constant 0 : i32
    %c0_i32_1 = arith.constant 0 : i32
    return %c0_i32, %c0_i32_0 : i32, i32
  }
  func.func @transform_3(%arg0: i32) -> (i32, i32) {
    %c0_i32 = arith.constant 0 : i32
    %c0_i32_0 = arith.constant 0 : i32
    %c0_i32_1 = arith.constant 0 : i32
    return %c0_i32, %c0_i32_0 : i32, i32
  }
  func.func @transform_4(%arg0: i32) -> (i32, i32) {
    %c0_i32 = arith.constant 0 : i32
    %c0_i32_0 = arith.constant 0 : i32
    %c0_i32_1 = arith.constant 0 : i32
    return %c0_i32, %c0_i32_0 : i32, i32
  }
  func.func @transform_5(%arg0: i32) -> (i32, i32, i32) {
    %c0_i32 = arith.constant 0 : i32
    %c0_i32_0 = arith.constant 0 : i32
    %c0_i32_1 = arith.constant 0 : i32
    return %arg0, %c0_i32, %c0_i32_0 : i32, i32, i32
  }
}

</mosaic_0001>

<llo_original>
// kernel: spatiotemporal_attention.1
$region0: #{spatiotemporal_attention.1}
  #allocation0 [shape = 'u32[]', space=smem, size = 0x4, offset = 0x4, fixed_abs, tag = 'smem constant byte address 0x4 - core index']
  #allocation1 [shape = 'u32[72,128]{1,0:T(1,128)}', space=vmem, size = 0x9000, scoped, tag = 'internal scratch']
  %s0 = inlined_call_operand.vmem [shape: f32[2,64,32], index: 0, kind: input, shape index: {}]
  %s1 = inlined_call_operand.vmem [shape: f32[32,96], index: 1, kind: input, shape index: {}]
  %s2 = inlined_call_operand.vmem [shape: f32[32,32], index: 2, kind: input, shape index: {}]
  %s3 = inlined_call_operand.vmem [shape: f32[1,32], index: 3, kind: input, shape index: {}]
  %s4 = inlined_call_operand.vmem [shape: f32[64,64], index: 4, kind: input, shape index: {}]
  %s5 = inlined_call_operand.vmem [shape: f32[2,64,32], index: 5, kind: output, shape index: {}]
  %s6 = sld [smem:[#allocation0]]
  $region53: #{spatiotemporal_attention.1} parent=0
    _
  %s8 = ssub.s32 1, %s6
  %s9 = scalar_select 0, %s8, %s6
  loop: start=0, step=1, limit=4
  $region2: #{spatiotemporal_attention.1} parent=0 // loop_pre_header
    _
  $region3: #{spatiotemporal_attention.1} parent=0 // loop_header
    %s11 = sphi 0, %s15
    %p12 = scmp.ge.s32.totalorder %s11, 4
    %s21 = sphi 0, %s23
    %s24 = sphi 0, %s21
    %s25 = sphi 0, %s24
    %s41 = sphi 0, %s25
    %s45 = sphi 0, %s45
    %s47 = sphi 0, %s45
    %s48 = sphi 0, %s47
    %s62 = sphi 0, %s48
    %s66 = sphi 0, %s66
    %s68 = sphi 0, %s66
    %s69 = sphi 0, %s68
    %s83 = sphi 0, %s69
    %s87 = sphi 0, %s87
    %s89 = sphi 0, %s87
    %s90 = sphi 0, %s89
    %s104 = sphi 0, %s90
    %s108 = sphi 0, %s108
    %s110 = sphi 0, %s108
    %s111 = sphi 0, %s110
    %s125 = sphi 0, %s111
    %s131 = sphi 0, %s133
    %s134 = sphi 0, %s131
    %s135 = sphi 0, %s134
    %s151 = sphi 0, %s135
  $region4: #{spatiotemporal_attention.1} parent=0 // loop_header_branch
    %14 = sbr.rel (%p12) target = $region8
  $region5: #{spatiotemporal_attention.1} parent=0 // loop_body
    %s16 = ssub.s32 %s11, 1
    %s17 = ssub.s32 %s11, 2
    %s18 = sadd.s32 %s11, 1
    %s19 = ssub.s32 %s11, %s18
    %p20 = scmp.eq.s32.totalorder %s19, 0
    %s22 = sadd.s32 %s21, 1
    %s23 = scalar_select %p20, %s21, %s22
    %p26 = pneg %p20
    %p27 = scmp.eq.s32.totalorder %s11, 1
    %p28 = por %p26, %p27
    %p29 = scmp.ne.s32.totalorder %s21, %s24
    %p30 = scmp.eq.s32.totalorder %s11, 0
    %p31 = por %p29, %p30
    %p32 = scmp.ne.s32.totalorder %s21, %s24
    %p33 = scmp.eq.s32.totalorder %s16, 1
    %p34 = por %p32, %p33
    %p35 = scmp.ne.s32.totalorder %s24, %s25
    %p36 = scmp.eq.s32.totalorder %s16, 0
    %p37 = por %p35, %p36
    %p38 = scmp.ne.s32.totalorder %s24, %s25
    %p39 = scmp.eq.s32.totalorder %s17, 1
    %p40 = por %p38, %p39
    %p42 = scmp.ne.s32.totalorder %s25, %s41
    %p43 = scmp.eq.s32.totalorder %s17, 0
    %p44 = por %p42, %p43
    %s46 = sadd.s32 %s45, 1
    %p49 = scmp.eq.s32.totalorder %s11, 1
    %p50 = scmp.ne.s32.totalorder %s45, %s47
    %p51 = scmp.eq.s32.totalorder %s11, 0
    %p52 = por %p50, %p51
    %p53 = scmp.ne.s32.totalorder %s45, %s47
    %p54 = scmp.eq.s32.totalorder %s16, 1
    %p55 = por %p53, %p54
    %p56 = scmp.ne.s32.totalorder %s47, %s48
    %p57 = scmp.eq.s32.totalorder %s16, 0
    %p58 = por %p56, %p57
    %p59 = scmp.ne.s32.totalorder %s47, %s48
    %p60 = scmp.eq.s32.totalorder %s17, 1
    %p61 = por %p59, %p60
    %p63 = scmp.ne.s32.totalorder %s48, %s62
    %p64 = scmp.eq.s32.totalorder %s17, 0
    %p65 = por %p63, %p64
    %s67 = sadd.s32 %s66, 1
    %p70 = scmp.eq.s32.totalorder %s11, 1
    %p71 = scmp.ne.s32.totalorder %s66, %s68
    %p72 = scmp.eq.s32.totalorder %s11, 0
    %p73 = por %p71, %p72
    %p74 = scmp.ne.s32.totalorder %s66, %s68
    %p75 = scmp.eq.s32.totalorder %s16, 1
    %p76 = por %p74, %p75
    %p77 = scmp.ne.s32.totalorder %s68, %s69
    %p78 = scmp.eq.s32.totalorder %s16, 0
    %p79 = por %p77, %p78
    %p80 = scmp.ne.s32.totalorder %s68, %s69
    %p81 = scmp.eq.s32.totalorder %s17, 1
    %p82 = por %p80, %p81
    %p84 = scmp.ne.s32.totalorder %s69, %s83
    %p85 = scmp.eq.s32.totalorder %s17, 0
    %p86 = por %p84, %p85
    %s88 = sadd.s32 %s87, 1
    %p91 = scmp.eq.s32.totalorder %s11, 1
    %p92 = scmp.ne.s32.totalorder %s87, %s89
    %p93 = scmp.eq.s32.totalorder %s11, 0
    %p94 = por %p92, %p93
    %p95 = scmp.ne.s32.totalorder %s87, %s89
    %p96 = scmp.eq.s32.totalorder %s16, 1
    %p97 = por %p95, %p96
    %p98 = scmp.ne.s32.totalorder %s89, %s90
    %p99 = scmp.eq.s32.totalorder %s16, 0
    %p100 = por %p98, %p99
    %p101 = scmp.ne.s32.totalorder %s89, %s90
    %p102 = scmp.eq.s32.totalorder %s17, 1
    %p103 = por %p101, %p102
    %p105 = scmp.ne.s32.totalorder %s90, %s104
    %p106 = scmp.eq.s32.totalorder %s17, 0
    %p107 = por %p105, %p106
    %s109 = sadd.s32 %s108, 1
    %p112 = scmp.eq.s32.totalorder %s11, 1
    %p113 = scmp.ne.s32.totalorder %s108, %s110
    %p114 = scmp.eq.s32.totalorder %s11, 0
    %p115 = por %p113, %p114
    %p116 = scmp.ne.s32.totalorder %s108, %s110
    %p117 = scmp.eq.s32.totalorder %s16, 1
    %p118 = por %p116, %p117
    %p119 = scmp.ne.s32.totalorder %s110, %s111
    %p120 = scmp.eq.s32.totalorder %s16, 0
    %p121 = por %p119, %p120
    %p122 = scmp.ne.s32.totalorder %s110, %s111
    %p123 = scmp.eq.s32.totalorder %s17, 1
    %p124 = por %p122, %p123
    %p126 = scmp.ne.s32.totalorder %s111, %s125
    %p127 = scmp.eq.s32.totalorder %s17, 0
    %p128 = por %p126, %p127
    %s129 = ssub.s32 %s11, %s18
    %p130 = scmp.eq.s32.totalorder %s129, 0
    %s132 = sadd.s32 %s131, 1
    %s133 = scalar_select %p130, %s131, %s132
    %p136 = pneg %p130
    %p137 = scmp.eq.s32.totalorder %s11, 1
    %p138 = por %p136, %p137
    %p139 = scmp.ne.s32.totalorder %s131, %s134
    %p140 = scmp.eq.s32.totalorder %s11, 0
    %p141 = por %p139, %p140
    %p142 = scmp.ne.s32.totalorder %s131, %s134
    %p143 = scmp.eq.s32.totalorder %s16, 1
    %p144 = por %p142, %p143
    %p145 = scmp.ne.s32.totalorder %s134, %s135
    %p146 = scmp.eq.s32.totalorder %s16, 0
    %p147 = por %p145, %p146
    %p148 = scmp.ne.s32.totalorder %s134, %s135
    %p149 = scmp.eq.s32.totalorder %s17, 1
    %p150 = por %p148, %p149
    %p152 = scmp.ne.s32.totalorder %s135, %s151
    %p153 = scmp.eq.s32.totalorder %s17, 0
    %p154 = por %p152, %p153
    %p155 = scmp.le.s32.totalorder 1, %s11
    %p156 = scmp.lt.s32.totalorder %s11, 3
    %p157 = pnand %p155, %p156
    %p158 = pneg %p157
    // Predicated region
    $region9: #{spatiotemporal_attention.1} parent=5 // pred_check
      _
    $region10: #{spatiotemporal_attention.1} parent=5 // pred_check_branch
      %160 = sbr.rel (%p157) target = $region12
    $region11: #{spatiotemporal_attention.1} parent=5 // pred_region
      %s161 = ssub.s32 %s11, 1
      // Predicated region
      $region13: #{spatiotemporal_attention.1} parent=11 // pred_check
        %p162 = pneg %p58
      $region14: #{spatiotemporal_attention.1} parent=11 // pred_check_branch
        %164 = sbr.rel (%p162) target = $region16
      $region15: #{spatiotemporal_attention.1} parent=11 // pred_region
        _
      $region16: #{spatiotemporal_attention.1} parent=11 // pred_fallthru
        _
      // Predicated region
      $region17: #{spatiotemporal_attention.1} parent=11 // pred_check
        %p165 = pneg %p79
      $region18: #{spatiotemporal_attention.1} parent=11 // pred_check_branch
        %167 = sbr.rel (%p165) target = $region20
      $region19: #{spatiotemporal_attention.1} parent=11 // pred_region
        _
      $region20: #{spatiotemporal_attention.1} parent=11 // pred_fallthru
        _
      // Predicated region
      $region21: #{spatiotemporal_attention.1} parent=11 // pred_check
        %p168 = pneg %p100
      $region22: #{spatiotemporal_attention.1} parent=11 // pred_check_branch
        %170 = sbr.rel (%p168) target = $region24
      $region23: #{spatiotemporal_attention.1} parent=11 // pred_region
        _
      $region24: #{spatiotemporal_attention.1} parent=11 // pred_fallthru
        _
      // Predicated region
      $region25: #{spatiotemporal_attention.1} parent=11 // pred_check
        %p171 = pneg %p121
      $region26: #{spatiotemporal_attention.1} parent=11 // pred_check_branch
        %173 = sbr.rel (%p171) target = $region28
      $region27: #{spatiotemporal_attention.1} parent=11 // pred_region
        _
      $region28: #{spatiotemporal_attention.1} parent=11 // pred_fallthru
        _
    $region12: #{spatiotemporal_attention.1} parent=5 // pred_fallthru
      _
    %p174 = scmp.lt.s32.totalorder %s11, 2
    // Predicated region
    $region29: #{spatiotemporal_attention.1} parent=5 // pred_check
      %p175 = pneg %p174
    $region30: #{spatiotemporal_attention.1} parent=5 // pred_check_branch
      %177 = sbr.rel (%p175) target = $region32
    $region31: #{spatiotemporal_attention.1} parent=5 // pred_region
      // Predicated region
      $region33: #{spatiotemporal_attention.1} parent=31 // pred_check
        %p178 = pneg %p31
      $region34: #{spatiotemporal_attention.1} parent=31 // pred_check_branch
        %180 = sbr.rel (%p178) target = $region36
      $region35: #{spatiotemporal_attention.1} parent=31 // pred_region
        %p181 = scmp.lt.s32.totalorder %s11, 1
        %s182 = scalar_select %p181, %s11, 1
        %s183 = smul.addr %s182, 8
        %s184 = smul.addr %s183, 8
        %s185 = scalar_lea.vmem %s0, %s184
      $region36: #{spatiotemporal_attention.1} parent=31 // pred_fallthru
        _
    $region32: #{spatiotemporal_attention.1} parent=5 // pred_fallthru
      _
    %p186 = scmp.le.s32.totalorder 1, %s11
    %p187 = scmp.lt.s32.totalorder %s11, 3
    %p188 = pnand %p186, %p187
    %p189 = pneg %p188
    // Predicated region
    $region37: #{spatiotemporal_attention.1} parent=5 // pred_check
      _
    $region38: #{spatiotemporal_attention.1} parent=5 // pred_check_branch
      %191 = sbr.rel (%p188) target = $region40
    $region39: #{spatiotemporal_attention.1} parent=5 // pred_region
      %s192 = ssub.s32 %s11, 1
      %p193 = scmp.lt.s32.totalorder %s16, 1
      %s194 = scalar_select %p193, %s16, 1
      %s195 = smul.addr %s194, 8
      %s196 = smul.addr %s195, 8
      %s197 = scalar_lea.vmem %s0, %s196
      %p198 = pneg %p37
      %p199 = pneg %p34
      %p200 = pneg %p58
      %p201 = pneg %p55
      %p202 = pneg %p79
      %p203 = pneg %p76
      %p204 = pneg %p100
      %p205 = pneg %p97
      %p206 = pneg %p121
      %p207 = pneg %p118
      %p208 = pneg %p147
      %p209 = pneg %p144
      %p210 = scmp.lt.s32.totalorder %s16, 1
      %s211 = scalar_select %p210, %s16, 1
      %s212 = smul.addr %s211, 8
      %s213 = smul.addr %s212, 8
      %s214 = scalar_lea.vmem %s5, %s213
      %p215 = scmp.lt.s32.totalorder %s16, 1
      %s216 = scalar_select %p215, %s16, 1
      %s217 = smul.addr %s216, 8
      %s218 = smul.addr %s217, 8
      %s219 = scalar_lea.vmem %s0, %s218
      %p220 = scmp.lt.s32.totalorder %s16, 1
      %s221 = scalar_select %p220, %s16, 1
      %s222 = smul.addr %s221, 8
      %s223 = smul.addr %s222, 8
      %s224 = scalar_lea.vmem %s5, %s223
      %v225 = vld [vmem:[%s219] sm:$0xff]
      %v226 = vld [vmem:[%s219 + $0x8] sm:$0xff]
      %v227 = vld [vmem:[%s219 + $0x10] sm:$0xff]
      %v228 = vld [vmem:[%s219 + $0x18] sm:$0xff]
      %v229 = vld [vmem:[%s219 + $0x20] sm:$0xff]
      %v230 = vld [vmem:[%s219 + $0x28] sm:$0xff]
      %v231 = vld [vmem:[%s219 + $0x30] sm:$0xff]
      %v232 = vld [vmem:[%s219 + $0x38] sm:$0xff]
      %v233 = vld [vmem:[%s1] sm:$0xff]
      %v234 = vld [vmem:[%s1 + $0x8] sm:$0xff]
      %v235 = vld [vmem:[%s1 + $0x10] sm:$0xff]
      %v236 = vld [vmem:[%s1 + $0x18] sm:$0xff]
      %v237 = vld [vmem:[%s2] sm:$0xff]
      %v238 = vld [vmem:[%s2 + $0x8] sm:$0xff]
      %v239 = vld [vmem:[%s2 + $0x10] sm:$0xff]
      %v240 = vld [vmem:[%s2 + $0x18] sm:$0xff]
      %v241 = vld [vmem:[%s4] sm:$0xff]
      %v242 = vld [vmem:[%s4 + $0x8] sm:$0xff]
      %v243 = vld [vmem:[%s4 + $0x10] sm:$0xff]
      %v244 = vld [vmem:[%s4 + $0x18] sm:$0xff]
      %v245 = vld [vmem:[%s4 + $0x20] sm:$0xff]
      %v246 = vld [vmem:[%s4 + $0x28] sm:$0xff]
      %v247 = vld [vmem:[%s4 + $0x30] sm:$0xff]
      %v248 = vld [vmem:[%s4 + $0x38] sm:$0xff]
      %vm249 = vcmask 261120
      %v251 = vsel %vm249, %v225, 0
      %v254 = vsel %vm249, %v226, 0
      %v257 = vsel %vm249, %v227, 0
      %v260 = vsel %vm249, %v228, 0
      %v263 = vsel %vm249, %v229, 0
      %v266 = vsel %vm249, %v230, 0
      %v269 = vsel %vm249, %v231, 0
      %v272 = vsel %vm249, %v232, 0
      %274 = vmatpush.msra.mxu0 0.0
      %275 = vmatpush.msra.mxu0 0.0
      %276 = vmatpush.msra.mxu0 0.0
      %277 = vmatpush.msra.mxu0 0.0
      %278 = vmatpush.msra.mxu0 0.0
      %279 = vmatpush.msra.mxu0 0.0
      %280 = vmatpush.msra.mxu0 0.0
      %281 = vmatpush.msra.mxu0 0.0
      %282 = vmatpush.msra.mxu0 0.0
      %283 = vmatpush.msra.mxu0 0.0
      %284 = vmatpush.msra.mxu0 0.0
      %285 = vmatpush.msra.mxu0 0.0
      %286 = vmatpush.msra.mxu0 %v236
      %287 = vmatpush.msra.mxu0 %v235
      %288 = vmatpush.msra.mxu0 %v234
      %289 = vmatpush.msra.mxu0 %v233
      %290 = vmatmul.f32.gmra.mxu0 %v251
      %v291 = vpop.f32.mrf.mxu0
      %v292 = vadd.f32 0.0, %v291
      %293 = vmatmul.f32.gmra.mxu0 %v254
      %v294 = vpop.f32.mrf.mxu0
      %v295 = vadd.f32 0.0, %v294
      %296 = vmatmul.f32.gmra.mxu0 %v257
      %v297 = vpop.f32.mrf.mxu0
      %v298 = vadd.f32 0.0, %v297
      %299 = vmatmul.f32.gmra.mxu0 %v260
      %v300 = vpop.f32.mrf.mxu0
      %v301 = vadd.f32 0.0, %v300
      %302 = vmatmul.f32.gmra.mxu0 %v263
      %v303 = vpop.f32.mrf.mxu0
      %v304 = vadd.f32 0.0, %v303
      %305 = vmatmul.f32.gmra.mxu0 %v266
      %v306 = vpop.f32.mrf.mxu0
      %v307 = vadd.f32 0.0, %v306
      %308 = vmatmul.f32.gmra.mxu0 %v269
      %v309 = vpop.f32.mrf.mxu0
      %v310 = vadd.f32 0.0, %v309
      %311 = vmatmul.f32.gmra.mxu0 %v272
      %v312 = vpop.f32.mrf.mxu0
      %v313 = vadd.f32 0.0, %v312
      %314 = vdwg.mxu0
      %323 = vrot.lane.b32.xlu0 %v292, 96
      %v324 = vpop.permute.xlu0 %323
      %325 = vrot.lane.b32.xlu0 %v295, 96
      %v326 = vpop.permute.xlu0 %325
      %327 = vrot.lane.b32.xlu0 %v298, 96
      %v328 = vpop.permute.xlu0 %327
      %329 = vrot.lane.b32.xlu0 %v301, 96
      %v330 = vpop.permute.xlu0 %329
      %331 = vrot.lane.b32.xlu0 %v304, 96
      %v332 = vpop.permute.xlu0 %331
      %333 = vrot.lane.b32.xlu0 %v307, 96
      %v334 = vpop.permute.xlu0 %333
      %335 = vrot.lane.b32.xlu0 %v310, 96
      %v336 = vpop.permute.xlu0 %335
      %337 = vrot.lane.b32.xlu0 %v313, 96
      %v338 = vpop.permute.xlu0 %337
      %vm339 = vcmask 64512
      %v340 = vsel %vm339, %v292, 0
      %v342 = vsel %vm339, %v295, 0
      %v344 = vsel %vm339, %v298, 0
      %v346 = vsel %vm339, %v301, 0
      %v348 = vsel %vm339, %v304, 0
      %v350 = vsel %vm339, %v307, 0
      %v352 = vsel %vm339, %v310, 0
      %v354 = vsel %vm339, %v313, 0
      %v356 = vsel %vm339, %v324, 0
      %v358 = vsel %vm339, %v326, 0
      %v360 = vsel %vm339, %v328, 0
      %v362 = vsel %vm339, %v330, 0
      %v364 = vsel %vm339, %v332, 0
      %v366 = vsel %vm339, %v334, 0
      %v368 = vsel %vm339, %v336, 0
      %v370 = vsel %vm339, %v338, 0
      %372 = vmatpush.xpose.msra.mxu0 0.0
      %373 = vmatpush.xpose.msra.mxu0 0.0
      %374 = vmatpush.xpose.msra.mxu0 0.0
      %375 = vmatpush.xpose.msra.mxu0 0.0
      %376 = vmatpush.xpose.msra.mxu0 0.0
      %377 = vmatpush.xpose.msra.mxu0 0.0
      %378 = vmatpush.xpose.msra.mxu0 0.0
      %379 = vmatpush.xpose.msra.mxu0 0.0
      %380 = vmatpush.xpose.msra.mxu0 %v370
      %381 = vmatpush.xpose.msra.mxu0 %v368
      %382 = vmatpush.xpose.msra.mxu0 %v366
      %383 = vmatpush.xpose.msra.mxu0 %v364
      %384 = vmatpush.xpose.msra.mxu0 %v362
      %385 = vmatpush.xpose.msra.mxu0 %v360
      %386 = vmatpush.xpose.msra.mxu0 %v358
      %387 = vmatpush.xpose.msra.mxu0 %v356
      %388 = vmatmul.f32.gmra.mxu0 %v340
      %v389 = vpop.f32.mrf.mxu0
      %v390 = vadd.f32 0.0, %v389
      %391 = vmatmul.f32.gmra.mxu0 %v342
      %v392 = vpop.f32.mrf.mxu0
      %v393 = vadd.f32 0.0, %v392
      %394 = vmatmul.f32.gmra.mxu0 %v344
      %v395 = vpop.f32.mrf.mxu0
      %v396 = vadd.f32 0.0, %v395
      %397 = vmatmul.f32.gmra.mxu0 %v346
      %v398 = vpop.f32.mrf.mxu0
      %v399 = vadd.f32 0.0, %v398
      %400 = vmatmul.f32.gmra.mxu0 %v348
      %v401 = vpop.f32.mrf.mxu0
      %v402 = vadd.f32 0.0, %v401
      %403 = vmatmul.f32.gmra.mxu0 %v350
      %v404 = vpop.f32.mrf.mxu0
      %v405 = vadd.f32 0.0, %v404
      %406 = vmatmul.f32.gmra.mxu0 %v352
      %v407 = vpop.f32.mrf.mxu0
      %v408 = vadd.f32 0.0, %v407
      %409 = vmatmul.f32.gmra.mxu0 %v354
      %v410 = vpop.f32.mrf.mxu0
      %v411 = vadd.f32 0.0, %v410
      %412 = vdwg.mxu0
      %v413 = vmul.f32 %v390, 0.35355338
      %v414 = vmul.f32 %v393, 0.35355338
      %v415 = vmul.f32 %v396, 0.35355338
      %v416 = vmul.f32 %v399, 0.35355338
      %v417 = vmul.f32 %v402, 0.35355338
      %v418 = vmul.f32 %v405, 0.35355338
      %v419 = vmul.f32 %v408, 0.35355338
      %v420 = vmul.f32 %v411, 0.35355338
      %v421 = vadd.f32 %v413, %v241
      %v422 = vadd.f32 %v414, %v242
      %v423 = vadd.f32 %v415, %v243
      %v424 = vadd.f32 %v416, %v244
      %v425 = vadd.f32 %v417, %v245
      %v426 = vadd.f32 %v418, %v246
      %v427 = vadd.f32 %v419, %v247
      %v428 = vadd.f32 %v420, %v248
      %vm429 = vcmask 523264
      %v430 = vsel %vm429, %v421, -inf
      %431 = vmax.xlane.f32.xlu0 %v430
      %v432 = vpop.xlane.xlu0 %431
      %v433 = vsel %vm429, %v422, -inf
      %434 = vmax.xlane.f32.xlu0 %v433
      %v435 = vpop.xlane.xlu0 %434
      %v436 = vsel %vm429, %v423, -inf
      %437 = vmax.xlane.f32.xlu0 %v436
      %v438 = vpop.xlane.xlu0 %437
      %v439 = vsel %vm429, %v424, -inf
      %440 = vmax.xlane.f32.xlu0 %v439
      %v441 = vpop.xlane.xlu0 %440
      %v442 = vsel %vm429, %v425, -inf
      %443 = vmax.xlane.f32.xlu0 %v442
      %v444 = vpop.xlane.xlu0 %443
      %v445 = vsel %vm429, %v426, -inf
      %446 = vmax.xlane.f32.xlu0 %v445
      %v447 = vpop.xlane.xlu0 %446
      %v448 = vsel %vm429, %v427, -inf
      %449 = vmax.xlane.f32.xlu0 %v448
      %v450 = vpop.xlane.xlu0 %449
      %v451 = vsel %vm429, %v428, -inf
      %452 = vmax.xlane.f32.xlu0 %v451
      %v453 = vpop.xlane.xlu0 %452
      %v454 = vsub.f32 %v421, %v432
      %v455 = vsub.f32 %v422, %v435
      %v456 = vsub.f32 %v423, %v438
      %v457 = vsub.f32 %v424, %v441
      %v458 = vsub.f32 %v425, %v444
      %v459 = vsub.f32 %v426, %v447
      %v460 = vsub.f32 %v427, %v450
      %v461 = vsub.f32 %v428, %v453
      %v462 = vmul.f32 %v454, 1.442695
      %v463 = vpow.pop %v462
      %v464 = vmul.f32 %v455, 1.442695
      %v465 = vpow.pop %v464
      %v466 = vmul.f32 %v456, 1.442695
      %v467 = vpow.pop %v466
      %v468 = vmul.f32 %v457, 1.442695
      %v469 = vpow.pop %v468
      %v470 = vmul.f32 %v458, 1.442695
      %v471 = vpow.pop %v470
      %v472 = vmul.f32 %v459, 1.442695
      %v473 = vpow.pop %v472
      %v474 = vmul.f32 %v460, 1.442695
      %v475 = vpow.pop %v474
      %v476 = vmul.f32 %v461, 1.442695
      %v477 = vpow.pop %v476
      %v478 = vsel %vm429, %v463, 0.0
      %479 = vadd.xlane.f32.xlu0 %v478
      %v480 = vpop.xlane.xlu0 %479
      %v481 = vsel %vm429, %v465, 0.0
      %482 = vadd.xlane.f32.xlu0 %v481
      %v483 = vpop.xlane.xlu0 %482
      %v484 = vsel %vm429, %v467, 0.0
      %485 = vadd.xlane.f32.xlu0 %v484
      %v486 = vpop.xlane.xlu0 %485
      %v487 = vsel %vm429, %v469, 0.0
      %488 = vadd.xlane.f32.xlu0 %v487
      %v489 = vpop.xlane.xlu0 %488
      %v490 = vsel %vm429, %v471, 0.0
      %491 = vadd.xlane.f32.xlu0 %v490
      %v492 = vpop.xlane.xlu0 %491
      %v493 = vsel %vm429, %v473, 0.0
      %494 = vadd.xlane.f32.xlu0 %v493
      %v495 = vpop.xlane.xlu0 %494
      %v496 = vsel %vm429, %v475, 0.0
      %497 = vadd.xlane.f32.xlu0 %v496
      %v498 = vpop.xlane.xlu0 %497
      %v499 = vsel %vm429, %v477, 0.0
      %500 = vadd.xlane.f32.xlu0 %v499
      %v501 = vpop.xlane.xlu0 %500
      %v502 = vrcp.pop %v480
      %v503 = vrcp.pop %v483
      %v504 = vrcp.pop %v486
      %v505 = vrcp.pop %v489
      %v506 = vrcp.pop %v492
      %v507 = vrcp.pop %v495
      %v508 = vrcp.pop %v498
      %v509 = vrcp.pop %v501
      %v510 = vmul.f32 %v463, %v502
      %v511 = vmul.f32 %v465, %v503
      %v512 = vmul.f32 %v467, %v504
      %v513 = vmul.f32 %v469, %v505
      %v514 = vmul.f32 %v471, %v506
      %v515 = vmul.f32 %v473, %v507
      %v516 = vmul.f32 %v475, %v508
      %v517 = vmul.f32 %v477, %v509
      %518 = vrot.lane.b32.xlu0 %v292, 64
      %v519 = vpop.permute.xlu0 %518
      %520 = vrot.lane.b32.xlu0 %v295, 64
      %v521 = vpop.permute.xlu0 %520
      %522 = vrot.lane.b32.xlu0 %v298, 64
      %v523 = vpop.permute.xlu0 %522
      %524 = vrot.lane.b32.xlu0 %v301, 64
      %v525 = vpop.permute.xlu0 %524
      %526 = vrot.lane.b32.xlu0 %v304, 64
      %v527 = vpop.permute.xlu0 %526
      %528 = vrot.lane.b32.xlu0 %v307, 64
      %v529 = vpop.permute.xlu0 %528
      %530 = vrot.lane.b32.xlu0 %v310, 64
      %v531 = vpop.permute.xlu0 %530
      %532 = vrot.lane.b32.xlu0 %v313, 64
      %v533 = vpop.permute.xlu0 %532
      %v543 = vsel %vm429, %v510, 0
      %v546 = vsel %vm429, %v511, 0
      %v549 = vsel %vm429, %v512, 0
      %v552 = vsel %vm429, %v513, 0
      %v555 = vsel %vm429, %v514, 0
      %v558 = vsel %vm429, %v515, 0
      %v561 = vsel %vm429, %v516, 0
      %v564 = vsel %vm429, %v517, 0
      %566 = vmatpush.msra.mxu0 0.0
      %567 = vmatpush.msra.mxu0 0.0
      %568 = vmatpush.msra.mxu0 0.0
      %569 = vmatpush.msra.mxu0 0.0
      %570 = vmatpush.msra.mxu0 0.0
      %571 = vmatpush.msra.mxu0 0.0
      %572 = vmatpush.msra.mxu0 0.0
      %573 = vmatpush.msra.mxu0 0.0
      %574 = vmatpush.msra.mxu0 %v533
      %575 = vmatpush.msra.mxu0 %v531
      %576 = vmatpush.msra.mxu0 %v529
      %577 = vmatpush.msra.mxu0 %v527
      %578 = vmatpush.msra.mxu0 %v525
      %579 = vmatpush.msra.mxu0 %v523
      %580 = vmatpush.msra.mxu0 %v521
      %581 = vmatpush.msra.mxu0 %v519
      %582 = vmatmul.f32.gmra.mxu0 %v543
      %v583 = vpop.f32.mrf.mxu0
      %v584 = vadd.f32 0.0, %v583
      %585 = vmatmul.f32.gmra.mxu0 %v546
      %v586 = vpop.f32.mrf.mxu0
      %v587 = vadd.f32 0.0, %v586
      %588 = vmatmul.f32.gmra.mxu0 %v549
      %v589 = vpop.f32.mrf.mxu0
      %v590 = vadd.f32 0.0, %v589
      %591 = vmatmul.f32.gmra.mxu0 %v552
      %v592 = vpop.f32.mrf.mxu0
      %v593 = vadd.f32 0.0, %v592
      %594 = vmatmul.f32.gmra.mxu0 %v555
      %v595 = vpop.f32.mrf.mxu0
      %v596 = vadd.f32 0.0, %v595
      %597 = vmatmul.f32.gmra.mxu0 %v558
      %v598 = vpop.f32.mrf.mxu0
      %v599 = vadd.f32 0.0, %v598
      %600 = vmatmul.f32.gmra.mxu0 %v561
      %v601 = vpop.f32.mrf.mxu0
      %v602 = vadd.f32 0.0, %v601
      %603 = vmatmul.f32.gmra.mxu0 %v564
      %v604 = vpop.f32.mrf.mxu0
      %v605 = vadd.f32 0.0, %v604
      %606 = vdwg.mxu0
      %607 = vrot.lane.b32.xlu0 %v292, 120
      %v608 = vpop.permute.xlu0 %607
      %609 = vrot.lane.b32.xlu0 %v295, 120
      %v610 = vpop.permute.xlu0 %609
      %611 = vrot.lane.b32.xlu0 %v298, 120
      %v612 = vpop.permute.xlu0 %611
      %613 = vrot.lane.b32.xlu0 %v301, 120
      %v614 = vpop.permute.xlu0 %613
      %615 = vrot.lane.b32.xlu0 %v304, 120
      %v616 = vpop.permute.xlu0 %615
      %617 = vrot.lane.b32.xlu0 %v307, 120
      %v618 = vpop.permute.xlu0 %617
      %619 = vrot.lane.b32.xlu0 %v310, 120
      %v620 = vpop.permute.xlu0 %619
      %621 = vrot.lane.b32.xlu0 %v313, 120
      %v622 = vpop.permute.xlu0 %621
      %623 = vrot.lane.b32.xlu0 %v292, 88
      %v624 = vpop.permute.xlu0 %623
      %625 = vrot.lane.b32.xlu0 %v295, 88
      %v626 = vpop.permute.xlu0 %625
      %627 = vrot.lane.b32.xlu0 %v298, 88
      %v628 = vpop.permute.xlu0 %627
      %629 = vrot.lane.b32.xlu0 %v301, 88
      %v630 = vpop.permute.xlu0 %629
      %631 = vrot.lane.b32.xlu0 %v304, 88
      %v632 = vpop.permute.xlu0 %631
      %633 = vrot.lane.b32.xlu0 %v307, 88
      %v634 = vpop.permute.xlu0 %633
      %635 = vrot.lane.b32.xlu0 %v310, 88
      %v636 = vpop.permute.xlu0 %635
      %637 = vrot.lane.b32.xlu0 %v313, 88
      %v638 = vpop.permute.xlu0 %637
      %v639 = vsel %vm339, %v608, 0
      %v641 = vsel %vm339, %v610, 0
      %v643 = vsel %vm339, %v612, 0
      %v645 = vsel %vm339, %v614, 0
      %v647 = vsel %vm339, %v616, 0
      %v649 = vsel %vm339, %v618, 0
      %v651 = vsel %vm339, %v620, 0
      %v653 = vsel %vm339, %v622, 0
      %v655 = vsel %vm339, %v624, 0
      %v657 = vsel %vm339, %v626, 0
      %v659 = vsel %vm339, %v628, 0
      %v661 = vsel %vm339, %v630, 0
      %v663 = vsel %vm339, %v632, 0
      %v665 = vsel %vm339, %v634, 0
      %v667 = vsel %vm339, %v636, 0
      %v669 = vsel %vm339, %v638, 0
      %671 = vmatpush.xpose.msra.mxu0 0.0
      %672 = vmatpush.xpose.msra.mxu0 0.0
      %673 = vmatpush.xpose.msra.mxu0 0.0
      %674 = vmatpush.xpose.msra.mxu0 0.0
      %675 = vmatpush.xpose.msra.mxu0 0.0
      %676 = vmatpush.xpose.msra.mxu0 0.0
      %677 = vmatpush.xpose.msra.mxu0 0.0
      %678 = vmatpush.xpose.msra.mxu0 0.0
      %679 = vmatpush.xpose.msra.mxu0 %v669
      %680 = vmatpush.xpose.msra.mxu0 %v667
      %681 = vmatpush.xpose.msra.mxu0 %v665
      %682 = vmatpush.xpose.msra.mxu0 %v663
      %683 = vmatpush.xpose.msra.mxu0 %v661
      %684 = vmatpush.xpose.msra.mxu0 %v659
      %685 = vmatpush.xpose.msra.mxu0 %v657
      %686 = vmatpush.xpose.msra.mxu0 %v655
      %687 = vmatmul.f32.gmra.mxu0 %v639
      %v688 = vpop.f32.mrf.mxu0
      %v689 = vadd.f32 0.0, %v688
      %690 = vmatmul.f32.gmra.mxu0 %v641
      %v691 = vpop.f32.mrf.mxu0
      %v692 = vadd.f32 0.0, %v691
      %693 = vmatmul.f32.gmra.mxu0 %v643
      %v694 = vpop.f32.mrf.mxu0
      %v695 = vadd.f32 0.0, %v694
      %696 = vmatmul.f32.gmra.mxu0 %v645
      %v697 = vpop.f32.mrf.mxu0
      %v698 = vadd.f32 0.0, %v697
      %699 = vmatmul.f32.gmra.mxu0 %v647
      %v700 = vpop.f32.mrf.mxu0
      %v701 = vadd.f32 0.0, %v700
      %702 = vmatmul.f32.gmra.mxu0 %v649
      %v703 = vpop.f32.mrf.mxu0
      %v704 = vadd.f32 0.0, %v703
      %705 = vmatmul.f32.gmra.mxu0 %v651
      %v706 = vpop.f32.mrf.mxu0
      %v707 = vadd.f32 0.0, %v706
      %708 = vmatmul.f32.gmra.mxu0 %v653
      %v709 = vpop.f32.mrf.mxu0
      %v710 = vadd.f32 0.0, %v709
      %711 = vdwg.mxu0
      %v712 = vmul.f32 %v689, 0.35355338
      %v713 = vmul.f32 %v692, 0.35355338
      %v714 = vmul.f32 %v695, 0.35355338
      %v715 = vmul.f32 %v698, 0.35355338
      %v716 = vmul.f32 %v701, 0.35355338
      %v717 = vmul.f32 %v704, 0.35355338
      %v718 = vmul.f32 %v707, 0.35355338
      %v719 = vmul.f32 %v710, 0.35355338
      %v720 = vadd.f32 %v712, %v241
      %v721 = vadd.f32 %v713, %v242
      %v722 = vadd.f32 %v714, %v243
      %v723 = vadd.f32 %v715, %v244
      %v724 = vadd.f32 %v716, %v245
      %v725 = vadd.f32 %v717, %v246
      %v726 = vadd.f32 %v718, %v247
      %v727 = vadd.f32 %v719, %v248
      %v728 = vsel %vm429, %v720, -inf
      %729 = vmax.xlane.f32.xlu0 %v728
      %v730 = vpop.xlane.xlu0 %729
      %v731 = vsel %vm429, %v721, -inf
      %732 = vmax.xlane.f32.xlu0 %v731
      %v733 = vpop.xlane.xlu0 %732
      %v734 = vsel %vm429, %v722, -inf
      %735 = vmax.xlane.f32.xlu0 %v734
      %v736 = vpop.xlane.xlu0 %735
      %v737 = vsel %vm429, %v723, -inf
      %738 = vmax.xlane.f32.xlu0 %v737
      %v739 = vpop.xlane.xlu0 %738
      %v740 = vsel %vm429, %v724, -inf
      %741 = vmax.xlane.f32.xlu0 %v740
      %v742 = vpop.xlane.xlu0 %741
      %v743 = vsel %vm429, %v725, -inf
      %744 = vmax.xlane.f32.xlu0 %v743
      %v745 = vpop.xlane.xlu0 %744
      %v746 = vsel %vm429, %v726, -inf
      %747 = vmax.xlane.f32.xlu0 %v746
      %v748 = vpop.xlane.xlu0 %747
      %v749 = vsel %vm429, %v727, -inf
      %750 = vmax.xlane.f32.xlu0 %v749
      %v751 = vpop.xlane.xlu0 %750
      %v752 = vsub.f32 %v720, %v730
      %v753 = vsub.f32 %v721, %v733
      %v754 = vsub.f32 %v722, %v736
      %v755 = vsub.f32 %v723, %v739
      %v756 = vsub.f32 %v724, %v742
      %v757 = vsub.f32 %v725, %v745
      %v758 = vsub.f32 %v726, %v748
      %v759 = vsub.f32 %v727, %v751
      %v760 = vmul.f32 %v752, 1.442695
      %v761 = vpow.pop %v760
      %v762 = vmul.f32 %v753, 1.442695
      %v763 = vpow.pop %v762
      %v764 = vmul.f32 %v754, 1.442695
      %v765 = vpow.pop %v764
      %v766 = vmul.f32 %v755, 1.442695
      %v767 = vpow.pop %v766
      %v768 = vmul.f32 %v756, 1.442695
      %v769 = vpow.pop %v768
      %v770 = vmul.f32 %v757, 1.442695
      %v771 = vpow.pop %v770
      %v772 = vmul.f32 %v758, 1.442695
      %v773 = vpow.pop %v772
      %v774 = vmul.f32 %v759, 1.442695
      %v775 = vpow.pop %v774
      %v776 = vsel %vm429, %v761, 0.0
      %777 = vadd.xlane.f32.xlu0 %v776
      %v778 = vpop.xlane.xlu0 %777
      %v779 = vsel %vm429, %v763, 0.0
      %780 = vadd.xlane.f32.xlu0 %v779
      %v781 = vpop.xlane.xlu0 %780
      %v782 = vsel %vm429, %v765, 0.0
      %783 = vadd.xlane.f32.xlu0 %v782
      %v784 = vpop.xlane.xlu0 %783
      %v785 = vsel %vm429, %v767, 0.0
      %786 = vadd.xlane.f32.xlu0 %v785
      %v787 = vpop.xlane.xlu0 %786
      %v788 = vsel %vm429, %v769, 0.0
      %789 = vadd.xlane.f32.xlu0 %v788
      %v790 = vpop.xlane.xlu0 %789
      %v791 = vsel %vm429, %v771, 0.0
      %792 = vadd.xlane.f32.xlu0 %v791
      %v793 = vpop.xlane.xlu0 %792
      %v794 = vsel %vm429, %v773, 0.0
      %795 = vadd.xlane.f32.xlu0 %v794
      %v796 = vpop.xlane.xlu0 %795
      %v797 = vsel %vm429, %v775, 0.0
      %798 = vadd.xlane.f32.xlu0 %v797
      %v799 = vpop.xlane.xlu0 %798
      %v800 = vrcp.pop %v778
      %v801 = vrcp.pop %v781
      %v802 = vrcp.pop %v784
      %v803 = vrcp.pop %v787
      %v804 = vrcp.pop %v790
      %v805 = vrcp.pop %v793
      %v806 = vrcp.pop %v796
      %v807 = vrcp.pop %v799
      %v808 = vmul.f32 %v761, %v800
      %v809 = vmul.f32 %v763, %v801
      %v810 = vmul.f32 %v765, %v802
      %v811 = vmul.f32 %v767, %v803
      %v812 = vmul.f32 %v769, %v804
      %v813 = vmul.f32 %v771, %v805
      %v814 = vmul.f32 %v773, %v806
      %v815 = vmul.f32 %v775, %v807
      %816 = vrot.lane.b32.xlu0 %v292, 56
      %v817 = vpop.permute.xlu0 %816
      %818 = vrot.lane.b32.xlu0 %v295, 56
      %v819 = vpop.permute.xlu0 %818
      %820 = vrot.lane.b32.xlu0 %v298, 56
      %v821 = vpop.permute.xlu0 %820
      %822 = vrot.lane.b32.xlu0 %v301, 56
      %v823 = vpop.permute.xlu0 %822
      %824 = vrot.lane.b32.xlu0 %v304, 56
      %v825 = vpop.permute.xlu0 %824
      %826 = vrot.lane.b32.xlu0 %v307, 56
      %v827 = vpop.permute.xlu0 %826
      %828 = vrot.lane.b32.xlu0 %v310, 56
      %v829 = vpop.permute.xlu0 %828
      %830 = vrot.lane.b32.xlu0 %v313, 56
      %v831 = vpop.permute.xlu0 %830
      %v841 = vsel %vm429, %v808, 0
      %v844 = vsel %vm429, %v809, 0
      %v847 = vsel %vm429, %v810, 0
      %v850 = vsel %vm429, %v811, 0
      %v853 = vsel %vm429, %v812, 0
      %v856 = vsel %vm429, %v813, 0
      %v859 = vsel %vm429, %v814, 0
      %v862 = vsel %vm429, %v815, 0
      %864 = vmatpush.msra.mxu0 0.0
      %865 = vmatpush.msra.mxu0 0.0
      %866 = vmatpush.msra.mxu0 0.0
      %867 = vmatpush.msra.mxu0 0.0
      %868 = vmatpush.msra.mxu0 0.0
      %869 = vmatpush.msra.mxu0 0.0
      %870 = vmatpush.msra.mxu0 0.0
      %871 = vmatpush.msra.mxu0 0.0
      %872 = vmatpush.msra.mxu0 %v831
      %873 = vmatpush.msra.mxu0 %v829
      %874 = vmatpush.msra.mxu0 %v827
      %875 = vmatpush.msra.mxu0 %v825
      %876 = vmatpush.msra.mxu0 %v823
      %877 = vmatpush.msra.mxu0 %v821
      %878 = vmatpush.msra.mxu0 %v819
      %879 = vmatpush.msra.mxu0 %v817
      %880 = vmatmul.f32.gmra.mxu0 %v841
      %v881 = vpop.f32.mrf.mxu0
      %v882 = vadd.f32 0.0, %v881
      %883 = vmatmul.f32.gmra.mxu0 %v844
      %v884 = vpop.f32.mrf.mxu0
      %v885 = vadd.f32 0.0, %v884
      %886 = vmatmul.f32.gmra.mxu0 %v847
      %v887 = vpop.f32.mrf.mxu0
      %v888 = vadd.f32 0.0, %v887
      %889 = vmatmul.f32.gmra.mxu0 %v850
      %v890 = vpop.f32.mrf.mxu0
      %v891 = vadd.f32 0.0, %v890
      %892 = vmatmul.f32.gmra.mxu0 %v853
      %v893 = vpop.f32.mrf.mxu0
      %v894 = vadd.f32 0.0, %v893
      %895 = vmatmul.f32.gmra.mxu0 %v856
      %v896 = vpop.f32.mrf.mxu0
      %v897 = vadd.f32 0.0, %v896
      %898 = vmatmul.f32.gmra.mxu0 %v859
      %v899 = vpop.f32.mrf.mxu0
      %v900 = vadd.f32 0.0, %v899
      %901 = vmatmul.f32.gmra.mxu0 %v862
      %v902 = vpop.f32.mrf.mxu0
      %v903 = vadd.f32 0.0, %v902
      %904 = vdwg.mxu0
      %v906 = vsel %vm339, %v882, 0
      %v909 = vsel %vm339, %v885, 0
      %v912 = vsel %vm339, %v888, 0
      %v915 = vsel %vm339, %v891, 0
      %v918 = vsel %vm339, %v894, 0
      %v921 = vsel %vm339, %v897, 0
      %v924 = vsel %vm339, %v900, 0
      %v927 = vsel %vm339, %v903, 0
      %929 = vmatpush.msra.mxu0 0.0
      %930 = vmatpush.msra.mxu0 0.0
      %931 = vmatpush.msra.mxu0 0.0
      %932 = vmatpush.msra.mxu0 0.0
      %933 = vmatpush.msra.mxu0 0.0
      %934 = vmatpush.msra.mxu0 0.0
      %935 = vmatpush.msra.mxu0 0.0
      %936 = vmatpush.msra.mxu0 0.0
      %937 = vmatpush.msra.mxu0 0.0
      %938 = vmatpush.msra.mxu0 0.0
      %939 = vmatpush.msra.mxu0 0.0
      %940 = vmatpush.msra.mxu0 0.0
      %941 = vmatpush.msra.mxu0 0.0
      %942 = vmatpush.msra.mxu0 0.0
      %943 = vmatpush.msra.mxu0 0.0
      %944 = vmatpush.msra.mxu0 %v238
      %945 = vmatmul.f32.gmra.mxu0 %v906
      %v946 = vpop.f32.mrf.mxu0
      %v947 = vadd.f32 0.0, %v946
      %948 = vmatmul.f32.gmra.mxu0 %v909
      %v949 = vpop.f32.mrf.mxu0
      %v950 = vadd.f32 0.0, %v949
      %951 = vmatmul.f32.gmra.mxu0 %v912
      %v952 = vpop.f32.mrf.mxu0
      %v953 = vadd.f32 0.0, %v952
      %954 = vmatmul.f32.gmra.mxu0 %v915
      %v955 = vpop.f32.mrf.mxu0
      %v956 = vadd.f32 0.0, %v955
      %957 = vmatmul.f32.gmra.mxu0 %v918
      %v958 = vpop.f32.mrf.mxu0
      %v959 = vadd.f32 0.0, %v958
      %960 = vmatmul.f32.gmra.mxu0 %v921
      %v961 = vpop.f32.mrf.mxu0
      %v962 = vadd.f32 0.0, %v961
      %963 = vmatmul.f32.gmra.mxu0 %v924
      %v964 = vpop.f32.mrf.mxu0
      %v965 = vadd.f32 0.0, %v964
      %966 = vmatmul.f32.gmra.mxu0 %v927
      %v967 = vpop.f32.mrf.mxu0
      %v968 = vadd.f32 0.0, %v967
      %969 = vdwg.mxu0
      %v971 = vsel %vm339, %v584, 0
      %v974 = vsel %vm339, %v587, 0
      %v977 = vsel %vm339, %v590, 0
      %v980 = vsel %vm339, %v593, 0
      %v983 = vsel %vm339, %v596, 0
      %v986 = vsel %vm339, %v599, 0
      %v989 = vsel %vm339, %v602, 0
      %v992 = vsel %vm339, %v605, 0
      %994 = vmatpush.msra.mxu0 0.0
      %995 = vmatpush.msra.mxu0 0.0
      %996 = vmatpush.msra.mxu0 0.0
      %997 = vmatpush.msra.mxu0 0.0
      %998 = vmatpush.msra.mxu0 0.0
      %999 = vmatpush.msra.mxu0 0.0
      %1000 = vmatpush.msra.mxu0 0.0
      %1001 = vmatpush.msra.mxu0 0.0
      %1002 = vmatpush.msra.mxu0 0.0
      %1003 = vmatpush.msra.mxu0 0.0
      %1004 = vmatpush.msra.mxu0 0.0
      %1005 = vmatpush.msra.mxu0 0.0
      %1006 = vmatpush.msra.mxu0 0.0
      %1007 = vmatpush.msra.mxu0 0.0
      %1008 = vmatpush.msra.mxu0 0.0
      %1009 = vmatpush.msra.mxu0 %v237
      %1010 = vmatmul.f32.gmra.mxu0 %v971
      %v1011 = vpop.f32.mrf.mxu0
      %v1012 = vadd.f32 %v947, %v1011
      %1013 = vmatmul.f32.gmra.mxu0 %v974
      %v1014 = vpop.f32.mrf.mxu0
      %v1015 = vadd.f32 %v950, %v1014
      %1016 = vmatmul.f32.gmra.mxu0 %v977
      %v1017 = vpop.f32.mrf.mxu0
      %v1018 = vadd.f32 %v953, %v1017
      %1019 = vmatmul.f32.gmra.mxu0 %v980
      %v1020 = vpop.f32.mrf.mxu0
      %v1021 = vadd.f32 %v956, %v1020
      %1022 = vmatmul.f32.gmra.mxu0 %v983
      %v1023 = vpop.f32.mrf.mxu0
      %v1024 = vadd.f32 %v959, %v1023
      %1025 = vmatmul.f32.gmra.mxu0 %v986
      %v1026 = vpop.f32.mrf.mxu0
      %v1027 = vadd.f32 %v962, %v1026
      %1028 = vmatmul.f32.gmra.mxu0 %v989
      %v1029 = vpop.f32.mrf.mxu0
      %v1030 = vadd.f32 %v965, %v1029
      %1031 = vmatmul.f32.gmra.mxu0 %v992
      %v1032 = vpop.f32.mrf.mxu0
      %v1033 = vadd.f32 %v968, %v1032
      %1034 = vdwg.mxu0
      %1035 = vrot.lane.b32.xlu0 %v292, 112
      %v1036 = vpop.permute.xlu0 %1035
      %1037 = vrot.lane.b32.xlu0 %v295, 112
      %v1038 = vpop.permute.xlu0 %1037
      %1039 = vrot.lane.b32.xlu0 %v298, 112
      %v1040 = vpop.permute.xlu0 %1039
      %1041 = vrot.lane.b32.xlu0 %v301, 112
      %v1042 = vpop.permute.xlu0 %1041
      %1043 = vrot.lane.b32.xlu0 %v304, 112
      %v1044 = vpop.permute.xlu0 %1043
      %1045 = vrot.lane.b32.xlu0 %v307, 112
      %v1046 = vpop.permute.xlu0 %1045
      %1047 = vrot.lane.b32.xlu0 %v310, 112
      %v1048 = vpop.permute.xlu0 %1047
      %1049 = vrot.lane.b32.xlu0 %v313, 112
      %v1050 = vpop.permute.xlu0 %1049
      %1051 = vrot.lane.b32.xlu0 %v292, 80
      %v1052 = vpop.permute.xlu0 %1051
      %1053 = vrot.lane.b32.xlu0 %v295, 80
      %v1054 = vpop.permute.xlu0 %1053
      %1055 = vrot.lane.b32.xlu0 %v298, 80
      %v1056 = vpop.permute.xlu0 %1055
      %1057 = vrot.lane.b32.xlu0 %v301, 80
      %v1058 = vpop.permute.xlu0 %1057
      %1059 = vrot.lane.b32.xlu0 %v304, 80
      %v1060 = vpop.permute.xlu0 %1059
      %1061 = vrot.lane.b32.xlu0 %v307, 80
      %v1062 = vpop.permute.xlu0 %1061
      %1063 = vrot.lane.b32.xlu0 %v310, 80
      %v1064 = vpop.permute.xlu0 %1063
      %1065 = vrot.lane.b32.xlu0 %v313, 80
      %v1066 = vpop.permute.xlu0 %1065
      %v1067 = vsel %vm339, %v1036, 0
      %v1069 = vsel %vm339, %v1038, 0
      %v1071 = vsel %vm339, %v1040, 0
      %v1073 = vsel %vm339, %v1042, 0
      %v1075 = vsel %vm339, %v1044, 0
      %v1077 = vsel %vm339, %v1046, 0
      %v1079 = vsel %vm339, %v1048, 0
      %v1081 = vsel %vm339, %v1050, 0
      %v1083 = vsel %vm339, %v1052, 0
      %v1085 = vsel %vm339, %v1054, 0
      %v1087 = vsel %vm339, %v1056, 0
      %v1089 = vsel %vm339, %v1058, 0
      %v1091 = vsel %vm339, %v1060, 0
      %v1093 = vsel %vm339, %v1062, 0
      %v1095 = vsel %vm339, %v1064, 0
      %v1097 = vsel %vm339, %v1066, 0
      %1099 = vmatpush.xpose.msra.mxu0 0.0
      %1100 = vmatpush.xpose.msra.mxu0 0.0
      %1101 = vmatpush.xpose.msra.mxu0 0.0
      %1102 = vmatpush.xpose.msra.mxu0 0.0
      %1103 = vmatpush.xpose.msra.mxu0 0.0
      %1104 = vmatpush.xpose.msra.mxu0 0.0
      %1105 = vmatpush.xpose.msra.mxu0 0.0
      %1106 = vmatpush.xpose.msra.mxu0 0.0
      %1107 = vmatpush.xpose.msra.mxu0 %v1097
      %1108 = vmatpush.xpose.msra.mxu0 %v1095
      %1109 = vmatpush.xpose.msra.mxu0 %v1093
      %1110 = vmatpush.xpose.msra.mxu0 %v1091
      %1111 = vmatpush.xpose.msra.mxu0 %v1089
      %1112 = vmatpush.xpose.msra.mxu0 %v1087
      %1113 = vmatpush.xpose.msra.mxu0 %v1085
      %1114 = vmatpush.xpose.msra.mxu0 %v1083
      %1115 = vmatmul.f32.gmra.mxu0 %v1067
      %v1116 = vpop.f32.mrf.mxu0
      %v1117 = vadd.f32 0.0, %v1116
      %1118 = vmatmul.f32.gmra.mxu0 %v1069
      %v1119 = vpop.f32.mrf.mxu0
      %v1120 = vadd.f32 0.0, %v1119
      %1121 = vmatmul.f32.gmra.mxu0 %v1071
      %v1122 = vpop.f32.mrf.mxu0
      %v1123 = vadd.f32 0.0, %v1122
      %1124 = vmatmul.f32.gmra.mxu0 %v1073
      %v1125 = vpop.f32.mrf.mxu0
      %v1126 = vadd.f32 0.0, %v1125
      %1127 = vmatmul.f32.gmra.mxu0 %v1075
      %v1128 = vpop.f32.mrf.mxu0
      %v1129 = vadd.f32 0.0, %v1128
      %1130 = vmatmul.f32.gmra.mxu0 %v1077
      %v1131 = vpop.f32.mrf.mxu0
      %v1132 = vadd.f32 0.0, %v1131
      %1133 = vmatmul.f32.gmra.mxu0 %v1079
      %v1134 = vpop.f32.mrf.mxu0
      %v1135 = vadd.f32 0.0, %v1134
      %1136 = vmatmul.f32.gmra.mxu0 %v1081
      %v1137 = vpop.f32.mrf.mxu0
      %v1138 = vadd.f32 0.0, %v1137
      %1139 = vdwg.mxu0
      %v1140 = vmul.f32 %v1117, 0.35355338
      %v1141 = vmul.f32 %v1120, 0.35355338
      %v1142 = vmul.f32 %v1123, 0.35355338
      %v1143 = vmul.f32 %v1126, 0.35355338
      %v1144 = vmul.f32 %v1129, 0.35355338
      %v1145 = vmul.f32 %v1132, 0.35355338
      %v1146 = vmul.f32 %v1135, 0.35355338
      %v1147 = vmul.f32 %v1138, 0.35355338
      %v1148 = vadd.f32 %v1140, %v241
      %v1149 = vadd.f32 %v1141, %v242
      %v1150 = vadd.f32 %v1142, %v243
      %v1151 = vadd.f32 %v1143, %v244
      %v1152 = vadd.f32 %v1144, %v245
      %v1153 = vadd.f32 %v1145, %v246
      %v1154 = vadd.f32 %v1146, %v247
      %v1155 = vadd.f32 %v1147, %v248
      %v1156 = vsel %vm429, %v1148, -inf
      %1157 = vmax.xlane.f32.xlu0 %v1156
      %v1158 = vpop.xlane.xlu0 %1157
      %v1159 = vsel %vm429, %v1149, -inf
      %1160 = vmax.xlane.f32.xlu0 %v1159
      %v1161 = vpop.xlane.xlu0 %1160
      %v1162 = vsel %vm429, %v1150, -inf
      %1163 = vmax.xlane.f32.xlu0 %v1162
      %v1164 = vpop.xlane.xlu0 %1163
      %v1165 = vsel %vm429, %v1151, -inf
      %1166 = vmax.xlane.f32.xlu0 %v1165
      %v1167 = vpop.xlane.xlu0 %1166
      %v1168 = vsel %vm429, %v1152, -inf
      %1169 = vmax.xlane.f32.xlu0 %v1168
      %v1170 = vpop.xlane.xlu0 %1169
      %v1171 = vsel %vm429, %v1153, -inf
      %1172 = vmax.xlane.f32.xlu0 %v1171
      %v1173 = vpop.xlane.xlu0 %1172
      %v1174 = vsel %vm429, %v1154, -inf
      %1175 = vmax.xlane.f32.xlu0 %v1174
      %v1176 = vpop.xlane.xlu0 %1175
      %v1177 = vsel %vm429, %v1155, -inf
      %1178 = vmax.xlane.f32.xlu0 %v1177
      %v1179 = vpop.xlane.xlu0 %1178
      %v1180 = vsub.f32 %v1148, %v1158
      %v1181 = vsub.f32 %v1149, %v1161
      %v1182 = vsub.f32 %v1150, %v1164
      %v1183 = vsub.f32 %v1151, %v1167
      %v1184 = vsub.f32 %v1152, %v1170
      %v1185 = vsub.f32 %v1153, %v1173
      %v1186 = vsub.f32 %v1154, %v1176
      %v1187 = vsub.f32 %v1155, %v1179
      %v1188 = vmul.f32 %v1180, 1.442695
      %v1189 = vpow.pop %v1188
      %v1190 = vmul.f32 %v1181, 1.442695
      %v1191 = vpow.pop %v1190
      %v1192 = vmul.f32 %v1182, 1.442695
      %v1193 = vpow.pop %v1192
      %v1194 = vmul.f32 %v1183, 1.442695
      %v1195 = vpow.pop %v1194
      %v1196 = vmul.f32 %v1184, 1.442695
      %v1197 = vpow.pop %v1196
      %v1198 = vmul.f32 %v1185, 1.442695
      %v1199 = vpow.pop %v1198
      %v1200 = vmul.f32 %v1186, 1.442695
      %v1201 = vpow.pop %v1200
      %v1202 = vmul.f32 %v1187, 1.442695
      %v1203 = vpow.pop %v1202
      %v1204 = vsel %vm429, %v1189, 0.0
      %1205 = vadd.xlane.f32.xlu0 %v1204
      %v1206 = vpop.xlane.xlu0 %1205
      %v1207 = vsel %vm429, %v1191, 0.0
      %1208 = vadd.xlane.f32.xlu0 %v1207
      %v1209 = vpop.xlane.xlu0 %1208
      %v1210 = vsel %vm429, %v1193, 0.0
      %1211 = vadd.xlane.f32.xlu0 %v1210
      %v1212 = vpop.xlane.xlu0 %1211
      %v1213 = vsel %vm429, %v1195, 0.0
      %1214 = vadd.xlane.f32.xlu0 %v1213
      %v1215 = vpop.xlane.xlu0 %1214
      %v1216 = vsel %vm429, %v1197, 0.0
      %1217 = vadd.xlane.f32.xlu0 %v1216
      %v1218 = vpop.xlane.xlu0 %1217
      %v1219 = vsel %vm429, %v1199, 0.0
      %1220 = vadd.xlane.f32.xlu0 %v1219
      %v1221 = vpop.xlane.xlu0 %1220
      %v1222 = vsel %vm429, %v1201, 0.0
      %1223 = vadd.xlane.f32.xlu0 %v1222
      %v1224 = vpop.xlane.xlu0 %1223
      %v1225 = vsel %vm429, %v1203, 0.0
      %1226 = vadd.xlane.f32.xlu0 %v1225
      %v1227 = vpop.xlane.xlu0 %1226
      %v1228 = vrcp.pop %v1206
      %v1229 = vrcp.pop %v1209
      %v1230 = vrcp.pop %v1212
      %v1231 = vrcp.pop %v1215
      %v1232 = vrcp.pop %v1218
      %v1233 = vrcp.pop %v1221
      %v1234 = vrcp.pop %v1224
      %v1235 = vrcp.pop %v1227
      %v1236 = vmul.f32 %v1189, %v1228
      %v1237 = vmul.f32 %v1191, %v1229
      %v1238 = vmul.f32 %v1193, %v1230
      %v1239 = vmul.f32 %v1195, %v1231
      %v1240 = vmul.f32 %v1197, %v1232
      %v1241 = vmul.f32 %v1199, %v1233
      %v1242 = vmul.f32 %v1201, %v1234
      %v1243 = vmul.f32 %v1203, %v1235
      %1244 = vrot.lane.b32.xlu0 %v292, 48
      %v1245 = vpop.permute.xlu0 %1244
      %1246 = vrot.lane.b32.xlu0 %v295, 48
      %v1247 = vpop.permute.xlu0 %1246
      %1248 = vrot.lane.b32.xlu0 %v298, 48
      %v1249 = vpop.permute.xlu0 %1248
      %1250 = vrot.lane.b32.xlu0 %v301, 48
      %v1251 = vpop.permute.xlu0 %1250
      %1252 = vrot.lane.b32.xlu0 %v304, 48
      %v1253 = vpop.permute.xlu0 %1252
      %1254 = vrot.lane.b32.xlu0 %v307, 48
      %v1255 = vpop.permute.xlu0 %1254
      %1256 = vrot.lane.b32.xlu0 %v310, 48
      %v1257 = vpop.permute.xlu0 %1256
      %1258 = vrot.lane.b32.xlu0 %v313, 48
      %v1259 = vpop.permute.xlu0 %1258
      %v1269 = vsel %vm429, %v1236, 0
      %v1272 = vsel %vm429, %v1237, 0
      %v1275 = vsel %vm429, %v1238, 0
      %v1278 = vsel %vm429, %v1239, 0
      %v1281 = vsel %vm429, %v1240, 0
      %v1284 = vsel %vm429, %v1241, 0
      %v1287 = vsel %vm429, %v1242, 0
      %v1290 = vsel %vm429, %v1243, 0
      %1292 = vmatpush.msra.mxu0 0.0
      %1293 = vmatpush.msra.mxu0 0.0
      %1294 = vmatpush.msra.mxu0 0.0
      %1295 = vmatpush.msra.mxu0 0.0
      %1296 = vmatpush.msra.mxu0 0.0
      %1297 = vmatpush.msra.mxu0 0.0
      %1298 = vmatpush.msra.mxu0 0.0
      %1299 = vmatpush.msra.mxu0 0.0
      %1300 = vmatpush.msra.mxu0 %v1259
      %1301 = vmatpush.msra.mxu0 %v1257
      %1302 = vmatpush.msra.mxu0 %v1255
      %1303 = vmatpush.msra.mxu0 %v1253
      %1304 = vmatpush.msra.mxu0 %v1251
      %1305 = vmatpush.msra.mxu0 %v1249
      %1306 = vmatpush.msra.mxu0 %v1247
      %1307 = vmatpush.msra.mxu0 %v1245
      %1308 = vmatmul.f32.gmra.mxu0 %v1269
      %v1309 = vpop.f32.mrf.mxu0
      %v1310 = vadd.f32 0.0, %v1309
      %1311 = vmatmul.f32.gmra.mxu0 %v1272
      %v1312 = vpop.f32.mrf.mxu0
      %v1313 = vadd.f32 0.0, %v1312
      %1314 = vmatmul.f32.gmra.mxu0 %v1275
      %v1315 = vpop.f32.mrf.mxu0
      %v1316 = vadd.f32 0.0, %v1315
      %1317 = vmatmul.f32.gmra.mxu0 %v1278
      %v1318 = vpop.f32.mrf.mxu0
      %v1319 = vadd.f32 0.0, %v1318
      %1320 = vmatmul.f32.gmra.mxu0 %v1281
      %v1321 = vpop.f32.mrf.mxu0
      %v1322 = vadd.f32 0.0, %v1321
      %1323 = vmatmul.f32.gmra.mxu0 %v1284
      %v1324 = vpop.f32.mrf.mxu0
      %v1325 = vadd.f32 0.0, %v1324
      %1326 = vmatmul.f32.gmra.mxu0 %v1287
      %v1327 = vpop.f32.mrf.mxu0
      %v1328 = vadd.f32 0.0, %v1327
      %1329 = vmatmul.f32.gmra.mxu0 %v1290
      %v1330 = vpop.f32.mrf.mxu0
      %v1331 = vadd.f32 0.0, %v1330
      %1332 = vdwg.mxu0
      %v1334 = vsel %vm339, %v1310, 0
      %v1337 = vsel %vm339, %v1313, 0
      %v1340 = vsel %vm339, %v1316, 0
      %v1343 = vsel %vm339, %v1319, 0
      %v1346 = vsel %vm339, %v1322, 0
      %v1349 = vsel %vm339, %v1325, 0
      %v1352 = vsel %vm339, %v1328, 0
      %v1355 = vsel %vm339, %v1331, 0
      %1357 = vmatpush.msra.mxu0 0.0
      %1358 = vmatpush.msra.mxu0 0.0
      %1359 = vmatpush.msra.mxu0 0.0
      %1360 = vmatpush.msra.mxu0 0.0
      %1361 = vmatpush.msra.mxu0 0.0
      %1362 = vmatpush.msra.mxu0 0.0
      %1363 = vmatpush.msra.mxu0 0.0
      %1364 = vmatpush.msra.mxu0 0.0
      %1365 = vmatpush.msra.mxu0 0.0
      %1366 = vmatpush.msra.mxu0 0.0
      %1367 = vmatpush.msra.mxu0 0.0
      %1368 = vmatpush.msra.mxu0 0.0
      %1369 = vmatpush.msra.mxu0 0.0
      %1370 = vmatpush.msra.mxu0 0.0
      %1371 = vmatpush.msra.mxu0 0.0
      %1372 = vmatpush.msra.mxu0 %v239
      %1373 = vmatmul.f32.gmra.mxu0 %v1334
      %v1374 = vpop.f32.mrf.mxu0
      %v1375 = vadd.f32 0.0, %v1374
      %1376 = vmatmul.f32.gmra.mxu0 %v1337
      %v1377 = vpop.f32.mrf.mxu0
      %v1378 = vadd.f32 0.0, %v1377
      %1379 = vmatmul.f32.gmra.mxu0 %v1340
      %v1380 = vpop.f32.mrf.mxu0
      %v1381 = vadd.f32 0.0, %v1380
      %1382 = vmatmul.f32.gmra.mxu0 %v1343
      %v1383 = vpop.f32.mrf.mxu0
      %v1384 = vadd.f32 0.0, %v1383
      %1385 = vmatmul.f32.gmra.mxu0 %v1346
      %v1386 = vpop.f32.mrf.mxu0
      %v1387 = vadd.f32 0.0, %v1386
      %1388 = vmatmul.f32.gmra.mxu0 %v1349
      %v1389 = vpop.f32.mrf.mxu0
      %v1390 = vadd.f32 0.0, %v1389
      %1391 = vmatmul.f32.gmra.mxu0 %v1352
      %v1392 = vpop.f32.mrf.mxu0
      %v1393 = vadd.f32 0.0, %v1392
      %1394 = vmatmul.f32.gmra.mxu0 %v1355
      %v1395 = vpop.f32.mrf.mxu0
      %v1396 = vadd.f32 0.0, %v1395
      %1397 = vdwg.mxu0
      %v1398 = vadd.f32 %v1012, %v1375
      %v1399 = vadd.f32 %v1015, %v1378
      %v1400 = vadd.f32 %v1018, %v1381
      %v1401 = vadd.f32 %v1021, %v1384
      %v1402 = vadd.f32 %v1024, %v1387
      %v1403 = vadd.f32 %v1027, %v1390
      %v1404 = vadd.f32 %v1030, %v1393
      %v1405 = vadd.f32 %v1033, %v1396
      %1406 = vrot.lane.b32.xlu0 %v292, 104
      %v1407 = vpop.permute.xlu0 %1406
      %1408 = vrot.lane.b32.xlu0 %v295, 104
      %v1409 = vpop.permute.xlu0 %1408
      %1410 = vrot.lane.b32.xlu0 %v298, 104
      %v1411 = vpop.permute.xlu0 %1410
      %1412 = vrot.lane.b32.xlu0 %v301, 104
      %v1413 = vpop.permute.xlu0 %1412
      %1414 = vrot.lane.b32.xlu0 %v304, 104
      %v1415 = vpop.permute.xlu0 %1414
      %1416 = vrot.lane.b32.xlu0 %v307, 104
      %v1417 = vpop.permute.xlu0 %1416
      %1418 = vrot.lane.b32.xlu0 %v310, 104
      %v1419 = vpop.permute.xlu0 %1418
      %1420 = vrot.lane.b32.xlu0 %v313, 104
      %v1421 = vpop.permute.xlu0 %1420
      %1422 = vrot.lane.b32.xlu0 %v292, 72
      %v1423 = vpop.permute.xlu0 %1422
      %1424 = vrot.lane.b32.xlu0 %v295, 72
      %v1425 = vpop.permute.xlu0 %1424
      %1426 = vrot.lane.b32.xlu0 %v298, 72
      %v1427 = vpop.permute.xlu0 %1426
      %1428 = vrot.lane.b32.xlu0 %v301, 72
      %v1429 = vpop.permute.xlu0 %1428
      %1430 = vrot.lane.b32.xlu0 %v304, 72
      %v1431 = vpop.permute.xlu0 %1430
      %1432 = vrot.lane.b32.xlu0 %v307, 72
      %v1433 = vpop.permute.xlu0 %1432
      %1434 = vrot.lane.b32.xlu0 %v310, 72
      %v1435 = vpop.permute.xlu0 %1434
      %1436 = vrot.lane.b32.xlu0 %v313, 72
      %v1437 = vpop.permute.xlu0 %1436
      %v1438 = vsel %vm339, %v1407, 0
      %v1440 = vsel %vm339, %v1409, 0
      %v1442 = vsel %vm339, %v1411, 0
      %v1444 = vsel %vm339, %v1413, 0
      %v1446 = vsel %vm339, %v1415, 0
      %v1448 = vsel %vm339, %v1417, 0
      %v1450 = vsel %vm339, %v1419, 0
      %v1452 = vsel %vm339, %v1421, 0
      %v1454 = vsel %vm339, %v1423, 0
      %v1456 = vsel %vm339, %v1425, 0
      %v1458 = vsel %vm339, %v1427, 0
      %v1460 = vsel %vm339, %v1429, 0
      %v1462 = vsel %vm339, %v1431, 0
      %v1464 = vsel %vm339, %v1433, 0
      %v1466 = vsel %vm339, %v1435, 0
      %v1468 = vsel %vm339, %v1437, 0
      %1470 = vmatpush.xpose.msra.mxu0 0.0
      %1471 = vmatpush.xpose.msra.mxu0 0.0
      %1472 = vmatpush.xpose.msra.mxu0 0.0
      %1473 = vmatpush.xpose.msra.mxu0 0.0
      %1474 = vmatpush.xpose.msra.mxu0 0.0
      %1475 = vmatpush.xpose.msra.mxu0 0.0
      %1476 = vmatpush.xpose.msra.mxu0 0.0
      %1477 = vmatpush.xpose.msra.mxu0 0.0
      %1478 = vmatpush.xpose.msra.mxu0 %v1468
      %1479 = vmatpush.xpose.msra.mxu0 %v1466
      %1480 = vmatpush.xpose.msra.mxu0 %v1464
      %1481 = vmatpush.xpose.msra.mxu0 %v1462
      %1482 = vmatpush.xpose.msra.mxu0 %v1460
      %1483 = vmatpush.xpose.msra.mxu0 %v1458
      %1484 = vmatpush.xpose.msra.mxu0 %v1456
      %1485 = vmatpush.xpose.msra.mxu0 %v1454
      %1486 = vmatmul.f32.gmra.mxu0 %v1438
      %v1487 = vpop.f32.mrf.mxu0
      %v1488 = vadd.f32 0.0, %v1487
      %1489 = vmatmul.f32.gmra.mxu0 %v1440
      %v1490 = vpop.f32.mrf.mxu0
      %v1491 = vadd.f32 0.0, %v1490
      %1492 = vmatmul.f32.gmra.mxu0 %v1442
      %v1493 = vpop.f32.mrf.mxu0
      %v1494 = vadd.f32 0.0, %v1493
      %1495 = vmatmul.f32.gmra.mxu0 %v1444
      %v1496 = vpop.f32.mrf.mxu0
      %v1497 = vadd.f32 0.0, %v1496
      %1498 = vmatmul.f32.gmra.mxu0 %v1446
      %v1499 = vpop.f32.mrf.mxu0
      %v1500 = vadd.f32 0.0, %v1499
      %1501 = vmatmul.f32.gmra.mxu0 %v1448
      %v1502 = vpop.f32.mrf.mxu0
      %v1503 = vadd.f32 0.0, %v1502
      %1504 = vmatmul.f32.gmra.mxu0 %v1450
      %v1505 = vpop.f32.mrf.mxu0
      %v1506 = vadd.f32 0.0, %v1505
      %1507 = vmatmul.f32.gmra.mxu0 %v1452
      %v1508 = vpop.f32.mrf.mxu0
      %v1509 = vadd.f32 0.0, %v1508
      %1510 = vdwg.mxu0
      %v1511 = vmul.f32 %v1488, 0.35355338
      %v1512 = vmul.f32 %v1491, 0.35355338
      %v1513 = vmul.f32 %v1494, 0.35355338
      %v1514 = vmul.f32 %v1497, 0.35355338
      %v1515 = vmul.f32 %v1500, 0.35355338
      %v1516 = vmul.f32 %v1503, 0.35355338
      %v1517 = vmul.f32 %v1506, 0.35355338
      %v1518 = vmul.f32 %v1509, 0.35355338
      %v1519 = vadd.f32 %v1511, %v241
      %v1520 = vadd.f32 %v1512, %v242
      %v1521 = vadd.f32 %v1513, %v243
      %v1522 = vadd.f32 %v1514, %v244
      %v1523 = vadd.f32 %v1515, %v245
      %v1524 = vadd.f32 %v1516, %v246
      %v1525 = vadd.f32 %v1517, %v247
      %v1526 = vadd.f32 %v1518, %v248
      %v1527 = vsel %vm429, %v1519, -inf
      %1528 = vmax.xlane.f32.xlu0 %v1527
      %v1529 = vpop.xlane.xlu0 %1528
      %v1530 = vsel %vm429, %v1520, -inf
      %1531 = vmax.xlane.f32.xlu0 %v1530
      %v1532 = vpop.xlane.xlu0 %1531
      %v1533 = vsel %vm429, %v1521, -inf
      %1534 = vmax.xlane.f32.xlu0 %v1533
      %v1535 = vpop.xlane.xlu0 %1534
      %v1536 = vsel %vm429, %v1522, -inf
      %1537 = vmax.xlane.f32.xlu0 %v1536
      %v1538 = vpop.xlane.xlu0 %1537
      %v1539 = vsel %vm429, %v1523, -inf
      %1540 = vmax.xlane.f32.xlu0 %v1539
      %v1541 = vpop.xlane.xlu0 %1540
      %v1542 = vsel %vm429, %v1524, -inf
      %1543 = vmax.xlane.f32.xlu0 %v1542
      %v1544 = vpop.xlane.xlu0 %1543
      %v1545 = vsel %vm429, %v1525, -inf
      %1546 = vmax.xlane.f32.xlu0 %v1545
      %v1547 = vpop.xlane.xlu0 %1546
      %v1548 = vsel %vm429, %v1526, -inf
      %1549 = vmax.xlane.f32.xlu0 %v1548
      %v1550 = vpop.xlane.xlu0 %1549
      %v1551 = vsub.f32 %v1519, %v1529
      %v1552 = vsub.f32 %v1520, %v1532
      %v1553 = vsub.f32 %v1521, %v1535
      %v1554 = vsub.f32 %v1522, %v1538
      %v1555 = vsub.f32 %v1523, %v1541
      %v1556 = vsub.f32 %v1524, %v1544
      %v1557 = vsub.f32 %v1525, %v1547
      %v1558 = vsub.f32 %v1526, %v1550
      %v1559 = vmul.f32 %v1551, 1.442695
      %v1560 = vpow.pop %v1559
      %v1561 = vmul.f32 %v1552, 1.442695
      %v1562 = vpow.pop %v1561
      %v1563 = vmul.f32 %v1553, 1.442695
      %v1564 = vpow.pop %v1563
      %v1565 = vmul.f32 %v1554, 1.442695
      %v1566 = vpow.pop %v1565
      %v1567 = vmul.f32 %v1555, 1.442695
      %v1568 = vpow.pop %v1567
      %v1569 = vmul.f32 %v1556, 1.442695
      %v1570 = vpow.pop %v1569
      %v1571 = vmul.f32 %v1557, 1.442695
      %v1572 = vpow.pop %v1571
      %v1573 = vmul.f32 %v1558, 1.442695
      %v1574 = vpow.pop %v1573
      %v1575 = vsel %vm429, %v1560, 0.0
      %1576 = vadd.xlane.f32.xlu0 %v1575
      %v1577 = vpop.xlane.xlu0 %1576
      %v1578 = vsel %vm429, %v1562, 0.0
      %1579 = vadd.xlane.f32.xlu0 %v1578
      %v1580 = vpop.xlane.xlu0 %1579
      %v1581 = vsel %vm429, %v1564, 0.0
      %1582 = vadd.xlane.f32.xlu0 %v1581
      %v1583 = vpop.xlane.xlu0 %1582
      %v1584 = vsel %vm429, %v1566, 0.0
      %1585 = vadd.xlane.f32.xlu0 %v1584
      %v1586 = vpop.xlane.xlu0 %1585
      %v1587 = vsel %vm429, %v1568, 0.0
      %1588 = vadd.xlane.f32.xlu0 %v1587
      %v1589 = vpop.xlane.xlu0 %1588
      %v1590 = vsel %vm429, %v1570, 0.0
      %1591 = vadd.xlane.f32.xlu0 %v1590
      %v1592 = vpop.xlane.xlu0 %1591
      %v1593 = vsel %vm429, %v1572, 0.0
      %1594 = vadd.xlane.f32.xlu0 %v1593
      %v1595 = vpop.xlane.xlu0 %1594
      %v1596 = vsel %vm429, %v1574, 0.0
      %1597 = vadd.xlane.f32.xlu0 %v1596
      %v1598 = vpop.xlane.xlu0 %1597
      %v1599 = vrcp.pop %v1577
      %v1600 = vrcp.pop %v1580
      %v1601 = vrcp.pop %v1583
      %v1602 = vrcp.pop %v1586
      %v1603 = vrcp.pop %v1589
      %v1604 = vrcp.pop %v1592
      %v1605 = vrcp.pop %v1595
      %v1606 = vrcp.pop %v1598
      %v1607 = vmul.f32 %v1560, %v1599
      %v1608 = vmul.f32 %v1562, %v1600
      %v1609 = vmul.f32 %v1564, %v1601
      %v1610 = vmul.f32 %v1566, %v1602
      %v1611 = vmul.f32 %v1568, %v1603
      %v1612 = vmul.f32 %v1570, %v1604
      %v1613 = vmul.f32 %v1572, %v1605
      %v1614 = vmul.f32 %v1574, %v1606
      %1615 = vrot.lane.b32.xlu0 %v292, 40
      %v1616 = vpop.permute.xlu0 %1615
      %1617 = vrot.lane.b32.xlu0 %v295, 40
      %v1618 = vpop.permute.xlu0 %1617
      %1619 = vrot.lane.b32.xlu0 %v298, 40
      %v1620 = vpop.permute.xlu0 %1619
      %1621 = vrot.lane.b32.xlu0 %v301, 40
      %v1622 = vpop.permute.xlu0 %1621
      %1623 = vrot.lane.b32.xlu0 %v304, 40
      %v1624 = vpop.permute.xlu0 %1623
      %1625 = vrot.lane.b32.xlu0 %v307, 40
      %v1626 = vpop.permute.xlu0 %1625
      %1627 = vrot.lane.b32.xlu0 %v310, 40
      %v1628 = vpop.permute.xlu0 %1627
      %1629 = vrot.lane.b32.xlu0 %v313, 40
      %v1630 = vpop.permute.xlu0 %1629
      %v1640 = vsel %vm429, %v1607, 0
      %v1643 = vsel %vm429, %v1608, 0
      %v1646 = vsel %vm429, %v1609, 0
      %v1649 = vsel %vm429, %v1610, 0
      %v1652 = vsel %vm429, %v1611, 0
      %v1655 = vsel %vm429, %v1612, 0
      %v1658 = vsel %vm429, %v1613, 0
      %v1661 = vsel %vm429, %v1614, 0
      %1663 = vmatpush.msra.mxu0 0.0
      %1664 = vmatpush.msra.mxu0 0.0
      %1665 = vmatpush.msra.mxu0 0.0
      %1666 = vmatpush.msra.mxu0 0.0
      %1667 = vmatpush.msra.mxu0 0.0
      %1668 = vmatpush.msra.mxu0 0.0
      %1669 = vmatpush.msra.mxu0 0.0
      %1670 = vmatpush.msra.mxu0 0.0
      %1671 = vmatpush.msra.mxu0 %v1630
      %1672 = vmatpush.msra.mxu0 %v1628
      %1673 = vmatpush.msra.mxu0 %v1626
      %1674 = vmatpush.msra.mxu0 %v1624
      %1675 = vmatpush.msra.mxu0 %v1622
      %1676 = vmatpush.msra.mxu0 %v1620
      %1677 = vmatpush.msra.mxu0 %v1618
      %1678 = vmatpush.msra.mxu0 %v1616
      %1679 = vmatmul.f32.gmra.mxu0 %v1640
      %v1680 = vpop.f32.mrf.mxu0
      %v1681 = vadd.f32 0.0, %v1680
      %1682 = vmatmul.f32.gmra.mxu0 %v1643
      %v1683 = vpop.f32.mrf.mxu0
      %v1684 = vadd.f32 0.0, %v1683
      %1685 = vmatmul.f32.gmra.mxu0 %v1646
      %v1686 = vpop.f32.mrf.mxu0
      %v1687 = vadd.f32 0.0, %v1686
      %1688 = vmatmul.f32.gmra.mxu0 %v1649
      %v1689 = vpop.f32.mrf.mxu0
      %v1690 = vadd.f32 0.0, %v1689
      %1691 = vmatmul.f32.gmra.mxu0 %v1652
      %v1692 = vpop.f32.mrf.mxu0
      %v1693 = vadd.f32 0.0, %v1692
      %1694 = vmatmul.f32.gmra.mxu0 %v1655
      %v1695 = vpop.f32.mrf.mxu0
      %v1696 = vadd.f32 0.0, %v1695
      %1697 = vmatmul.f32.gmra.mxu0 %v1658
      %v1698 = vpop.f32.mrf.mxu0
      %v1699 = vadd.f32 0.0, %v1698
      %1700 = vmatmul.f32.gmra.mxu0 %v1661
      %v1701 = vpop.f32.mrf.mxu0
      %v1702 = vadd.f32 0.0, %v1701
      %1703 = vdwg.mxu0
      %v1705 = vsel %vm339, %v1681, 0
      %v1708 = vsel %vm339, %v1684, 0
      %v1711 = vsel %vm339, %v1687, 0
      %v1714 = vsel %vm339, %v1690, 0
      %v1717 = vsel %vm339, %v1693, 0
      %v1720 = vsel %vm339, %v1696, 0
      %v1723 = vsel %vm339, %v1699, 0
      %v1726 = vsel %vm339, %v1702, 0
      %1728 = vmatpush.msra.mxu0 0.0
      %1729 = vmatpush.msra.mxu0 0.0
      %1730 = vmatpush.msra.mxu0 0.0
      %1731 = vmatpush.msra.mxu0 0.0
      %1732 = vmatpush.msra.mxu0 0.0
      %1733 = vmatpush.msra.mxu0 0.0
      %1734 = vmatpush.msra.mxu0 0.0
      %1735 = vmatpush.msra.mxu0 0.0
      %1736 = vmatpush.msra.mxu0 0.0
      %1737 = vmatpush.msra.mxu0 0.0
      %1738 = vmatpush.msra.mxu0 0.0
      %1739 = vmatpush.msra.mxu0 0.0
      %1740 = vmatpush.msra.mxu0 0.0
      %1741 = vmatpush.msra.mxu0 0.0
      %1742 = vmatpush.msra.mxu0 0.0
      %1743 = vmatpush.msra.mxu0 %v240
      %1744 = vmatmul.f32.gmra.mxu0 %v1705
      %v1745 = vpop.f32.mrf.mxu0
      %v1746 = vadd.f32 0.0, %v1745
      %1747 = vmatmul.f32.gmra.mxu0 %v1708
      %v1748 = vpop.f32.mrf.mxu0
      %v1749 = vadd.f32 0.0, %v1748
      %1750 = vmatmul.f32.gmra.mxu0 %v1711
      %v1751 = vpop.f32.mrf.mxu0
      %v1752 = vadd.f32 0.0, %v1751
      %1753 = vmatmul.f32.gmra.mxu0 %v1714
      %v1754 = vpop.f32.mrf.mxu0
      %v1755 = vadd.f32 0.0, %v1754
      %1756 = vmatmul.f32.gmra.mxu0 %v1717
      %v1757 = vpop.f32.mrf.mxu0
      %v1758 = vadd.f32 0.0, %v1757
      %1759 = vmatmul.f32.gmra.mxu0 %v1720
      %v1760 = vpop.f32.mrf.mxu0
      %v1761 = vadd.f32 0.0, %v1760
      %1762 = vmatmul.f32.gmra.mxu0 %v1723
      %v1763 = vpop.f32.mrf.mxu0
      %v1764 = vadd.f32 0.0, %v1763
      %1765 = vmatmul.f32.gmra.mxu0 %v1726
      %v1766 = vpop.f32.mrf.mxu0
      %v1767 = vadd.f32 0.0, %v1766
      %1768 = vdwg.mxu0
      %v1769 = vadd.f32 %v1398, %v1746
      %v1770 = vadd.f32 %v1399, %v1749
      %v1771 = vadd.f32 %v1400, %v1752
      %v1772 = vadd.f32 %v1401, %v1755
      %v1773 = vadd.f32 %v1402, %v1758
      %v1774 = vadd.f32 %v1403, %v1761
      %v1775 = vadd.f32 %v1404, %v1764
      %v1776 = vadd.f32 %v1405, %v1767
      %v1777 = vld [vmem:[%s3] sm:$0x1]
      %v1779 = vperm.slane %v1777, 0
      %v1781 = vadd.f32 %v1769, %v1779
      %v1782 = vadd.f32 %v1770, %v1779
      %v1783 = vadd.f32 %v1771, %v1779
      %v1784 = vadd.f32 %v1772, %v1779
      %v1785 = vadd.f32 %v1773, %v1779
      %v1786 = vadd.f32 %v1774, %v1779
      %v1787 = vadd.f32 %v1775, %v1779
      %v1788 = vadd.f32 %v1776, %v1779
      %1789 = vst.msk [vmem:[%s224] sm:$0xff] %vm249, %v1781
      %1790 = vst.msk [vmem:[%s224 + $0x8] sm:$0xff] %vm249, %v1782
      %1791 = vst.msk [vmem:[%s224 + $0x10] sm:$0xff] %vm249, %v1783
      %1792 = vst.msk [vmem:[%s224 + $0x18] sm:$0xff] %vm249, %v1784
      %1793 = vst.msk [vmem:[%s224 + $0x20] sm:$0xff] %vm249, %v1785
      %1794 = vst.msk [vmem:[%s224 + $0x28] sm:$0xff] %vm249, %v1786
      %1795 = vst.msk [vmem:[%s224 + $0x30] sm:$0xff] %vm249, %v1787
      %1796 = vst.msk [vmem:[%s224 + $0x38] sm:$0xff] %vm249, %v1788
      %p1797 = scmp.lt.s32.totalorder %s16, 1
      %s1798 = scalar_select %p1797, %s16, 1
      %s1799 = smul.addr %s1798, 8
      %s1800 = smul.addr %s1799, 8
      %s1801 = scalar_lea.vmem %s5, %s1800
      // Predicated region
      $region41: #{spatiotemporal_attention.1} parent=39 // pred_check
        %p1802 = pneg %p144
      $region42: #{spatiotemporal_attention.1} parent=39 // pred_check_branch
        %1804 = sbr.rel (%p1802) target = $region44
      $region43: #{spatiotemporal_attention.1} parent=39 // pred_region
        _
      $region44: #{spatiotemporal_attention.1} parent=39 // pred_fallthru
        _
    $region40: #{spatiotemporal_attention.1} parent=5 // pred_fallthru
      _
    %p1805 = scmp.le.s32.totalorder 2, %s11
    // Predicated region
    $region45: #{spatiotemporal_attention.1} parent=5 // pred_check
      %p1806 = pneg %p1805
    $region46: #{spatiotemporal_attention.1} parent=5 // pred_check_branch
      %1808 = sbr.rel (%p1806) target = $region48
    $region47: #{spatiotemporal_attention.1} parent=5 // pred_region
      %s1809 = ssub.s32 %s11, 2
      // Predicated region
      $region49: #{spatiotemporal_attention.1} parent=47 // pred_check
        %p1810 = pneg %p150
      $region50: #{spatiotemporal_attention.1} parent=47 // pred_check_branch
        %1812 = sbr.rel (%p1810) target = $region52
      $region51: #{spatiotemporal_attention.1} parent=47 // pred_region
        %p1813 = scmp.lt.s32.totalorder %s17, 1
        %s1814 = scalar_select %p1813, %s17, 1
        %s1815 = smul.addr %s1814, 8
        %s1816 = smul.addr %s1815, 8
        %s1817 = scalar_lea.vmem %s5, %s1816
      $region52: #{spatiotemporal_attention.1} parent=47 // pred_fallthru
        _
    $region48: #{spatiotemporal_attention.1} parent=5 // pred_fallthru
      _
  $region6: #{spatiotemporal_attention.1} parent=0 // loop_footer
    %s15 = sadd.s32 1, %s11
  $region7: #{spatiotemporal_attention.1} parent=0 // loop_footer_branch
    %10 = sbr.rel target = $region3
  $region8: #{spatiotemporal_attention.1} parent=0 // loop_exit
    _

</llo_original>
